<compile_context>
chip_gen: v5e
topology: v5e:2x2
jax: 0.10.0
libtpu: 0.0.40
codegen_flags: <defaults>
</compile_context>

<pallas_src>
import jax
import jax.numpy as jnp
from jax import lax
from jax.experimental import pallas as pl
from jax.experimental.pallas import tpu as pltpu


# ------------------------------ small helpers -------------------------------

def _row_tile(m, bytes_per_row, target_bytes=2 << 20):
    """Largest divisor of m that is a multiple of 8 and keeps a block near
    target_bytes (returns m itself if m is small or no divisor exists; fine
    for the power-of-two shapes this module produces)."""
    cap = max(8, int(target_bytes) // max(int(bytes_per_row), 1))
    if m <= cap:
        return m
    for t in range(min(cap, m), 7, -1):
        if m % t == 0 and t % 8 == 0:
            return t
    return m


# ------------------------------- Pallas kernels ------------------------------

def _conv1x1_bias_kernel(x_ref, w_ref, b_ref, o_ref):
    # 1x1 convolution == per-pixel channel matmul + bias (bf16 in, f32 acc).
    y = jnp.dot(x_ref[...], w_ref[...], preferred_element_type=jnp.float32)
    o_ref[...] = (y + b_ref[...]).astype(o_ref.dtype)


def _upsample_mm_kernel(xcol_ref, w_ref, b_ref, y_ref, st_ref):
    # One (phase, row-tile) of the conv-transpose: a single K=4*Cin matmul
    # plus bias.  BN partial stats come from the f32 accumulator *before*
    # the bf16 downcast of the stored activation.
    acc = jnp.dot(xcol_ref[...], w_ref[...], preferred_element_type=jnp.float32)
    acc = acc + b_ref[...]
    y_ref[...] = acc.astype(y_ref.dtype)
    st_ref[0:1, :] = jnp.sum(acc, axis=0, keepdims=True)
    st_ref[1:2, :] = jnp.sum(acc * acc, axis=0, keepdims=True)


def _scale_shift_relu_kernel(x_ref, s_ref, t_ref, o_ref):
    # BatchNorm affine (precomputed scale/shift) + ReLU; f32 math, bf16 store.
    y = x_ref[...].astype(jnp.float32) * s_ref[...] + t_ref[...]
    o_ref[...] = jnp.maximum(y, 0.0).astype(o_ref.dtype)


def _conv1x1_nchw_kernel(x_ref, w_ref, b_ref, o_ref):
    # Final 1x1 conv written directly in NCHW layout so the stored output is
    # lane-dense (lanes = H*W) instead of 3-lane masked stores.
    y = lax.dot_general(w_ref[...], x_ref[...], (((1,), (1,)), ((), ())),
                        preferred_element_type=jnp.float32)
    o_ref[...] = y + b_ref[...]


# ------------------------------ kernel wrappers ------------------------------

def conv1x1_bias(x2d, w, b, out_dtype=jnp.bfloat16):
    # x2d: (M, Cin) bf16, w: (Cin, Cout) bf16, b: (1, Cout) f32
    M, Cin = x2d.shape
    Cout = w.shape[1]
    tm = _row_tile(M, (Cin + Cout) * 2)
    return pl.pallas_call(
        _conv1x1_bias_kernel,
        grid=(M // tm,),
        in_specs=[
            pl.BlockSpec((tm, Cin), lambda i: (i, 0)),
            pl.BlockSpec((Cin, Cout), lambda i: (0, 0)),   # revisited -> 1 DMA
            pl.BlockSpec((1, Cout), lambda i: (0, 0)),
        ],
        out_specs=pl.BlockSpec((tm, Cout), lambda i: (i, 0)),
        out_shape=jax.ShapeDtypeStruct((M, Cout), out_dtype),
        compiler_params=pltpu.CompilerParams(dimension_semantics=("parallel",)),
    )(x2d, w, b)


def upsample_matmul_stats(xcol, w_phases, b):
    # xcol: (4, M, 4*Cin) bf16, w_phases: (4, 4*Cin, Cout) bf16, b: (1, Cout).
    # Returns pre-BN activations (4, M, Cout) bf16 and per-(phase, row-tile)
    # partial BN stats (4, nt, 2, Cout) f32.
    P, M, K = xcol.shape
    Cout = w_phases.shape[2]
    # ~2 MB xcol tiles keep (weight x2 buffers + xcol x2 + y) well under the
    # v7x 32 MiB scoped / 64 MiB physical VMEM even at Cin=1024.
    tm = _row_tile(M, K * 2 + Cout * 2 + Cout * 4)
    nt = M // tm
    y, st = pl.pallas_call(
        _upsample_mm_kernel,
        # Phase-major grid: the phase weight block index is constant across
        # the inner row-tile axis -> weight stays VMEM-resident (1 DMA/phase).
        grid=(P, nt),
        in_specs=[
            pl.BlockSpec((None, tm, K), lambda p, i: (p, i, 0)),
            pl.BlockSpec((None, K, Cout), lambda p, i: (p, 0, 0)),
            pl.BlockSpec((1, Cout), lambda p, i: (0, 0)),
        ],
        out_specs=[
            pl.BlockSpec((None, tm, Cout), lambda p, i: (p, i, 0)),
            pl.BlockSpec((None, None, 2, Cout), lambda p, i: (p, i, 0, 0)),
        ],
        out_shape=[
            jax.ShapeDtypeStruct((P, M, Cout), jnp.bfloat16),
            jax.ShapeDtypeStruct((P, nt, 2, Cout), jnp.float32),
        ],
        compiler_params=pltpu.CompilerParams(
            dimension_semantics=("parallel", "arbitrary"),
            vmem_limit_bytes=32 << 20),
    )(xcol, w_phases, b)
    return y, st


def bn_relu(y, scale, shift, out_dtype=jnp.bfloat16):
    # y: (P, M, C) bf16; scale/shift: (1, C) f32.
    # When C < 128, fold k = 128//C rows into the lane axis (scale/shift tiled
    # k times) so stores are full 128-lane vst; tile rows to ~4 MB blocks.
    P, M, C = y.shape
    rows = P * M
    k = 1
    if C < 128 and 128 % C == 0:
        k = 128 // C
        while k > 1 and rows % k != 0:
            k //= 2
    x2d = y.reshape(rows // k, k * C)
    s2d = jnp.tile(scale, (1, k))
    t2d = jnp.tile(shift, (1, k))
    R, Ce = x2d.shape
    tm = _row_tile(R, Ce * 4, target_bytes=4 << 20)
    out = pl.pallas_call(
        _scale_shift_relu_kernel,
        grid=(R // tm,),
        in_specs=[
            pl.BlockSpec((tm, Ce), lambda i: (i, 0)),
            pl.BlockSpec((1, Ce), lambda i: (0, 0)),
            pl.BlockSpec((1, Ce), lambda i: (0, 0)),
        ],
        out_specs=pl.BlockSpec((tm, Ce), lambda i: (i, 0)),
        out_shape=jax.ShapeDtypeStruct((R, Ce), out_dtype),
        compiler_params=pltpu.CompilerParams(dimension_semantics=("parallel",)),
    )(x2d, s2d, t2d)
    return out.reshape(P, M, C)


def conv1x1_to_nchw(x3d, wT, b):
    # x3d: (N, HW, Cin) bf16, wT: (Cout, Cin) bf16, b: (Cout, 1) f32
    # Returns (N, Cout, HW) f32 with a lane-dense HW minor dimension.
    N, HW, Cin = x3d.shape
    Cout = wT.shape[0]
    return pl.pallas_call(
        _conv1x1_nchw_kernel,
        grid=(N,),
        in_specs=[
            pl.BlockSpec((None, HW, Cin), lambda n: (n, 0, 0)),
            pl.BlockSpec((Cout, Cin), lambda n: (0, 0)),
            pl.BlockSpec((Cout, 1), lambda n: (0, 0)),
        ],
        out_specs=pl.BlockSpec((None, Cout, HW), lambda n: (n, 0, 0)),
        out_shape=jax.ShapeDtypeStruct((N, Cout, HW), jnp.float32),
        compiler_params=pltpu.CompilerParams(dimension_semantics=("parallel",)),
    )(x3d, wT, b)


# --------------------- layout transforms done once in XLA --------------------

def _im2col_phases(x_nhwc, H, W):
    # Zero-free sub-pixel decomposition of ConvTranspose2d(k=4, s=2, p=1):
    # for output phase (ph, pw), tap (th, tw) reads the padded input window at
    # offset (ph+th, pw+tw) and uses kernel element (3-ph-2*th, 3-pw-2*tw).
    # Build the (4, N*H*W, 4*Cin) tap matrix with static XLA slices so the
    # Pallas kernel is a pure matmul (no in-kernel dynamic gather).
    xp = jnp.pad(x_nhwc, ((0, 0), (1, 1), (1, 1), (0, 0)))
    cols = []
    for ph in range(2):
        for pw in range(2):
            taps = [xp[:, ph + th:ph + th + H, pw + tw:pw + tw + W, :]
                    for th in range(2) for tw in range(2)]
            cols.append(jnp.concatenate(taps, axis=-1))       # (N, H, W, 4*Cin)
    x4 = jnp.stack(cols, axis=0)                              # (4, N, H, W, 4*Cin)
    return x4.reshape(4, -1, x4.shape[-1])


def _phase_weights(w):
    # w: PyTorch ConvTranspose2d weight (Cin, Cout, 4, 4) f32.
    # Stack the 4 taps of each output phase along K -> (4, 4*Cin, Cout) bf16,
    # with tap/phase ordering matching _im2col_phases.
    phases = []
    for ph in range(2):
        for pw in range(2):
            taps = []
            for t_h in range(2):
                for t_w in range(2):
                    kh = 3 - ph - 2 * t_h
                    kw = 3 - pw - 2 * t_w
                    taps.append(w[:, :, kh, kw])               # (Cin, Cout)
            phases.append(jnp.concatenate(taps, axis=0))       # (4*Cin, Cout)
    return jnp.stack(phases, axis=0).astype(jnp.bfloat16)


# ---------------------------------- Generator --------------------------------

class Generator:
    def __init__(self, key, start_shape=2, latent_channels=32,
                 start_channels=1024, upsamplings=5):
        self.start_shape = start_shape
        self.latent_channels = latent_channels
        self.start_channels = start_channels
        self.upsamplings = upsamplings
        self._init_params(key)
        self._forward = jax.jit(self._forward_impl)

    def _init_params(self, key):
        def nxt():
            nonlocal key
            key, sub = jax.random.split(key)
            return sub

        lc, sc = self.latent_channels, self.start_channels

        # conv1: 1x1, latent -> start_channels (PyTorch Conv2d weight layout).
        w1 = 0.05 * jax.random.normal(nxt(), (sc, lc, 1, 1), jnp.float32)
        b1 = 0.05 * jax.random.normal(nxt(), (sc,), jnp.float32)

        up = []
        c = sc
        for _ in range(self.upsamplings):
            w = 0.05 * jax.random.normal(nxt(), (c, c // 2, 4, 4), jnp.float32)
            b = 0.05 * jax.random.normal(nxt(), (c // 2,), jnp.float32)
            up.append({
                "w": _phase_weights(w),                 # (4, 4*c, c//2) bf16
                "b": b.reshape(1, c // 2),
                "gamma": jnp.ones((c // 2,), jnp.float32),
                "beta": jnp.zeros((c // 2,), jnp.float32),
            })
            c //= 2
        self.final_channels = c

        # conv2: 1x1, c -> 3.
        w2 = 0.05 * jax.random.normal(nxt(), (3, c, 1, 1), jnp.float32)
        b2 = 0.05 * jax.random.normal(nxt(), (3,), jnp.float32)

        self.params = {
            "conv1_w": w1.reshape(sc, lc).T.astype(jnp.bfloat16),  # (lc, sc)
            "conv1_b": b1.reshape(1, sc),
            "up": up,
            "conv2_wT": w2.reshape(3, c).astype(jnp.bfloat16),     # (3, c)
            "conv2_b": b2.reshape(3, 1),
        }

    def _forward_impl(self, params, x_nchw):
        N = x_nchw.shape[0]
        H = W = self.start_shape

        # conv1: 1x1 conv == per-pixel channel matmul (+bias), bf16 operands.
        x = jnp.transpose(x_nchw, (0, 2, 3, 1)).reshape(
            N * H * W, self.latent_channels).astype(jnp.bfloat16)
        y = conv1x1_bias(x, params["conv1_w"], params["conv1_b"])
        x_nhwc = y.reshape(N, H, W, self.start_channels)

        for lyr in params["up"]:
            Cin = x_nhwc.shape[-1]
            Cout = Cin // 2

            # 4-phase zero-free tap matrix (XLA slices, no in-kernel gather).
            xcol = _im2col_phases(x_nhwc, H, W)          # (4, N*H*W, 4*Cin)
            y_pre, st = upsample_matmul_stats(xcol, lyr["w"], lyr["b"])

            # BatchNorm2d training-mode batch stats (biased variance).
            s = jnp.sum(st, axis=(0, 1))                 # (2, Cout)
            cnt = float(N * 4 * H * W)                   # = N * OH * OW
            mean = s[0] / cnt
            var = jnp.maximum(s[1] / cnt - mean * mean, 0.0)
            inv = lax.rsqrt(var + 1e-5)
            scale = (lyr["gamma"] * inv).reshape(1, Cout)
            shift = (lyr["beta"] - mean * lyr["gamma"] * inv).reshape(1, Cout)

            # Pass 2: lane-packed scale/shift + ReLU, bf16 for the next matmul.
            ybn = bn_relu(y_pre, scale, shift)           # (4, N*H*W, Cout)

            # Interleave the 4 output phases back into NHWC (cheap XLA glue on
            # a small bf16 array; the heavy traffic is the weights/matmuls).
            # TODO(synk): fuse phase interleave + halo pad + next-layer im2col
            # into the bn_relu kernel's output path to drop one activation pass.
            x_nhwc = (ybn.reshape(2, 2, N, H, W, Cout)
                         .transpose(2, 3, 0, 4, 1, 5)
                         .reshape(N, 2 * H, 2 * W, Cout))
            H, W = 2 * H, 2 * W

        # conv2: 1x1 conv, written directly as lane-dense NCHW.
        Cin = x_nhwc.shape[-1]
        out = conv1x1_to_nchw(x_nhwc.reshape(N, H * W, Cin),
                              params["conv2_wT"], params["conv2_b"])
        # NOTE: the reference forward() does not apply the Tanh activation.
        return out.reshape(N, 3, H, W)

    def __call__(self, x_nchw):
        return self._forward(self.params, x_nchw)


# ------------------------------------ main -----------------------------------

if __name__ == "__main__":
    key = jax.random.PRNGKey(0)
    k_x, k_p = jax.random.split(key)

    # small but structurally faithful config
    latent_channels = 16
    start_channels = 64
    upsamplings = 3
    start_shape = 2

    gen = Generator(k_p, start_shape=start_shape,
                    latent_channels=latent_channels,
                    start_channels=start_channels,
                    upsamplings=upsamplings)

    # input: (N, latent_channels, start_shape, start_shape), NCHW
    x = jax.random.normal(k_x, (2, latent_channels, start_shape, start_shape),
                          jnp.float32)

    out = jax.block_until_ready(gen(x))

    expected_hw = start_shape * (2 ** upsamplings)
    assert out.shape == (2, 3, expected_hw, expected_hw), out.shape
    assert out.dtype == jnp.float32
    assert bool(jnp.all(jnp.isfinite(out)))

    print("KERNEL_OK")
</pallas_src>

<mosaic_0001>
module attributes {stable_mosaic.version = 11 : i64} {
  func.func @_conv1x1_bias_kernel(%arg0: i32, %arg1: memref<8x16xbf16, #tpu.memory_space<vmem>>, %arg2: memref<16x64xbf16, #tpu.memory_space<vmem>>, %arg3: memref<1x64xf32, #tpu.memory_space<vmem>>, %arg4: memref<8x64xbf16, #tpu.memory_space<vmem>>) attributes {dimension_semantics = [#tpu.dimension_semantics<parallel>], iteration_bounds = array<i64: 1>, scalar_prefetch = 0 : i64, scratch_operands = 0 : i64, tpu.core_type = #tpu.core_type<tc>, window_params = [{transform_indices = @transform_0, window_bounds = array<i64: 8, 16>}, {pipeline_mode = #tpu.pipeline_mode<synchronous>, transform_indices = @transform_1, window_bounds = array<i64: 16, 64>}, {pipeline_mode = #tpu.pipeline_mode<synchronous>, transform_indices = @transform_2, window_bounds = array<i64: 1, 64>}, {transform_indices = @transform_3, window_bounds = array<i64: 8, 64>}]} {
    %c0 = arith.constant 0 : index
    %c0_0 = arith.constant 0 : index
    %0 = vector.load %arg1[%c0, %c0_0] : memref<8x16xbf16, #tpu.memory_space<vmem>>, vector<8x16xbf16>
    %c0_1 = arith.constant 0 : index
    %c0_2 = arith.constant 0 : index
    %1 = vector.load %arg2[%c0_1, %c0_2] : memref<16x64xbf16, #tpu.memory_space<vmem>>, vector<16x64xbf16>
    %cst = arith.constant dense<0.000000e+00> : vector<8x64xf32>
    %2 = tpu.matmul %0, %1, %cst {dimension_numbers = #tpu.dot_dimension_numbers<[1], [0], [0], [1], [0, 0, 1, 1], [], []>} : vector<8x16xbf16>, vector<16x64xbf16>, vector<8x64xf32> -> vector<8x64xf32>
    %c0_3 = arith.constant 0 : index
    %c0_4 = arith.constant 0 : index
    %3 = vector.load %arg3[%c0_3, %c0_4] : memref<1x64xf32, #tpu.memory_space<vmem>>, vector<1x64xf32>
    %4 = vector.broadcast %3 : vector<1x64xf32> to vector<8x64xf32>
    %5 = arith.addf %2, %4 : vector<8x64xf32>
    %6 = arith.truncf %5 : vector<8x64xf32> to vector<8x64xbf16>
    %c0_5 = arith.constant 0 : index
    %c0_6 = arith.constant 0 : index
    %7 = vector.load %arg4[%c0_5, %c0_6] : memref<8x64xbf16, #tpu.memory_space<vmem>>, vector<8x64xbf16>
    tpu.vector_store %arg4[%c0_5, %c0_6], %6 {strides = array<i32>} : memref<8x64xbf16, #tpu.memory_space<vmem>>, vector<8x64xbf16>,
    return
  }
  func.func @transform_0(%arg0: i32) -> (i32, i32) {
    %c0_i32 = arith.constant 0 : i32
    %c0_i32_0 = arith.constant 0 : i32
    return %arg0, %c0_i32 : i32, i32
  }
  func.func @transform_1(%arg0: i32) -> (i32, i32) {
    %c0_i32 = arith.constant 0 : i32
    %c0_i32_0 = arith.constant 0 : i32
    %c0_i32_1 = arith.constant 0 : i32
    return %c0_i32, %c0_i32_0 : i32, i32
  }
  func.func @transform_2(%arg0: i32) -> (i32, i32) {
    %c0_i32 = arith.constant 0 : i32
    %c0_i32_0 = arith.constant 0 : i32
    %c0_i32_1 = arith.constant 0 : i32
    return %c0_i32, %c0_i32_0 : i32, i32
  }
  func.func @transform_3(%arg0: i32) -> (i32, i32) {
    %c0_i32 = arith.constant 0 : i32
    %c0_i32_0 = arith.constant 0 : i32
    return %arg0, %c0_i32 : i32, i32
  }
}

module attributes {stable_mosaic.version = 11 : i64} {
  func.func @_upsample_mm_kernel(%arg0: i32, %arg1: i32, %arg2: memref<1x8x256xbf16, #tpu.memory_space<vmem>>, %arg3: memref<1x256x32xbf16, #tpu.memory_space<vmem>>, %arg4: memref<1x32xf32, #tpu.memory_space<vmem>>, %arg5: memref<1x8x32xbf16, #tpu.memory_space<vmem>>, %arg6: memref<1x1x2x32xf32, #tpu.memory_space<vmem>>) attributes {dimension_semantics = [#tpu.dimension_semantics<parallel>, #tpu.dimension_semantics<arbitrary>], iteration_bounds = array<i64: 4, 1>, scalar_prefetch = 0 : i64, scratch_operands = 0 : i64, tpu.core_type = #tpu.core_type<tc>, window_params = [{transform_indices = @transform_0, window_bounds = array<i64: 1, 8, 256>}, {transform_indices = @transform_1, window_bounds = array<i64: 1, 256, 32>}, {pipeline_mode = #tpu.pipeline_mode<synchronous>, transform_indices = @transform_2, window_bounds = array<i64: 1, 32>}, {transform_indices = @transform_3, window_bounds = array<i64: 1, 8, 32>}, {transform_indices = @transform_4, window_bounds = array<i64: 1, 1, 2, 32>}]} {
    %c0 = arith.constant 0 : index
    %c0_0 = arith.constant 0 : index
    %c0_1 = arith.constant 0 : index
    %0 = vector.load %arg2[%c0, %c0_0, %c0_1] : memref<1x8x256xbf16, #tpu.memory_space<vmem>>, vector<1x8x256xbf16>
    %1 = vector.shape_cast %0 : vector<1x8x256xbf16> to vector<8x256xbf16>
    %c0_2 = arith.constant 0 : index
    %c0_3 = arith.constant 0 : index
    %c0_4 = arith.constant 0 : index
    %2 = vector.load %arg3[%c0_2, %c0_3, %c0_4] : memref<1x256x32xbf16, #tpu.memory_space<vmem>>, vector<1x256x32xbf16>
    %3 = vector.shape_cast %2 : vector<1x256x32xbf16> to vector<256x32xbf16>
    %cst = arith.constant dense<0.000000e+00> : vector<8x32xf32>
    %4 = tpu.matmul %1, %3, %cst {dimension_numbers = #tpu.dot_dimension_numbers<[1], [0], [0], [1], [0, 0, 1, 1], [], []>} : vector<8x256xbf16>, vector<256x32xbf16>, vector<8x32xf32> -> vector<8x32xf32>
    %c0_5 = arith.constant 0 : index
    %c0_6 = arith.constant 0 : index
    %5 = vector.load %arg4[%c0_5, %c0_6] : memref<1x32xf32, #tpu.memory_space<vmem>>, vector<1x32xf32>
    %6 = vector.broadcast %5 : vector<1x32xf32> to vector<8x32xf32>
    %7 = arith.addf %4, %6 : vector<8x32xf32>
    %8 = arith.truncf %7 : vector<8x32xf32> to vector<8x32xbf16>
    %c0_7 = arith.constant 0 : index
    %c0_8 = arith.constant 0 : index
    %c0_9 = arith.constant 0 : index
    %9 = vector.load %arg5[%c0_7, %c0_8, %c0_9] : memref<1x8x32xbf16, #tpu.memory_space<vmem>>, vector<1x8x32xbf16>
    %10 = vector.shape_cast %9 : vector<1x8x32xbf16> to vector<8x32xbf16>
    %11 = vector.shape_cast %8 : vector<8x32xbf16> to vector<1x8x32xbf16>
    tpu.vector_store %arg5[%c0_7, %c0_8, %c0_9], %11 {strides = array<i32>} : memref<1x8x32xbf16, #tpu.memory_space<vmem>>, vector<1x8x32xbf16>,
    %cst_10 = arith.constant dense<0.000000e+00> : vector<32xf32>
    %12 = vector.multi_reduction <add>, %7, %cst_10 [0] : vector<8x32xf32> to vector<32xf32>
    %13 = vector.shape_cast %12 : vector<32xf32> to vector<1x32xf32>
    %c0_11 = arith.constant 0 : index
    %c0_12 = arith.constant 0 : index
    %c0_13 = arith.constant 0 : index
    %c0_14 = arith.constant 0 : index
    %14 = vector.load %arg6[%c0_11, %c0_12, %c0_13, %c0_14] : memref<1x1x2x32xf32, #tpu.memory_space<vmem>>, vector<1x1x1x32xf32>
    %15 = vector.shape_cast %14 : vector<1x1x1x32xf32> to vector<1x32xf32>
    %16 = vector.shape_cast %13 : vector<1x32xf32> to vector<1x1x1x32xf32>
    tpu.vector_store %arg6[%c0_11, %c0_12, %c0_13, %c0_14], %16 {strides = array<i32>} : memref<1x1x2x32xf32, #tpu.memory_space<vmem>>, vector<1x1x1x32xf32>,
    %17 = arith.mulf %7, %7 : vector<8x32xf32>
    %cst_15 = arith.constant dense<0.000000e+00> : vector<32xf32>
    %18 = vector.multi_reduction <add>, %17, %cst_15 [0] : vector<8x32xf32> to vector<32xf32>
    %19 = vector.shape_cast %18 : vector<32xf32> to vector<1x32xf32>
    %c0_16 = arith.constant 0 : index
    %c0_17 = arith.constant 0 : index
    %c1 = arith.constant 1 : index
    %c0_18 = arith.constant 0 : index
    %20 = vector.load %arg6[%c0_16, %c0_17, %c1, %c0_18] : memref<1x1x2x32xf32, #tpu.memory_space<vmem>>, vector<1x1x1x32xf32>
    %21 = vector.shape_cast %20 : vector<1x1x1x32xf32> to vector<1x32xf32>
    %22 = vector.shape_cast %19 : vector<1x32xf32> to vector<1x1x1x32xf32>
    tpu.vector_store %arg6[%c0_16, %c0_17, %c1, %c0_18], %22 {strides = array<i32>} : memref<1x1x2x32xf32, #tpu.memory_space<vmem>>, vector<1x1x1x32xf32>,
    return
  }
  func.func @transform_0(%arg0: i32, %arg1: i32) -> (i32, i32, i32) {
    %c0_i32 = arith.constant 0 : i32
    %c0_i32_0 = arith.constant 0 : i32
    return %arg0, %arg1, %c0_i32 : i32, i32, i32
  }
  func.func @transform_1(%arg0: i32, %arg1: i32) -> (i32, i32, i32) {
    %c0_i32 = arith.constant 0 : i32
    %c0_i32_0 = arith.constant 0 : i32
    %c0_i32_1 = arith.constant 0 : i32
    return %arg0, %c0_i32, %c0_i32_0 : i32, i32, i32
  }
  func.func @transform_2(%arg0: i32, %arg1: i32) -> (i32, i32) {
    %c0_i32 = arith.constant 0 : i32
    %c0_i32_0 = arith.constant 0 : i32
    %c0_i32_1 = arith.constant 0 : i32
    return %c0_i32, %c0_i32_0 : i32, i32
  }
  func.func @transform_3(%arg0: i32, %arg1: i32) -> (i32, i32, i32) {
    %c0_i32 = arith.constant 0 : i32
    %c0_i32_0 = arith.constant 0 : i32
    return %arg0, %arg1, %c0_i32 : i32, i32, i32
  }
  func.func @transform_4(%arg0: i32, %arg1: i32) -> (i32, i32, i32, i32) {
    %c0_i32 = arith.constant 0 : i32
    %c0_i32_0 = arith.constant 0 : i32
    %c0_i32_1 = arith.constant 0 : i32
    return %arg0, %arg1, %c0_i32, %c0_i32_0 : i32, i32, i32, i32
  }
}

module attributes {stable_mosaic.version = 11 : i64} {
  func.func @_scale_shift_relu_kernel(%arg0: i32, %arg1: memref<8x128xbf16, #tpu.memory_space<vmem>>, %arg2: memref<1x128xf32, #tpu.memory_space<vmem>>, %arg3: memref<1x128xf32, #tpu.memory_space<vmem>>, %arg4: memref<8x128xbf16, #tpu.memory_space<vmem>>) attributes {dimension_semantics = [#tpu.dimension_semantics<parallel>], iteration_bounds = array<i64: 1>, scalar_prefetch = 0 : i64, scratch_operands = 0 : i64, tpu.core_type = #tpu.core_type<tc>, window_params = [{transform_indices = @transform_0, window_bounds = array<i64: 8, 128>}, {pipeline_mode = #tpu.pipeline_mode<synchronous>, transform_indices = @transform_1, window_bounds = array<i64: 1, 128>}, {pipeline_mode = #tpu.pipeline_mode<synchronous>, transform_indices = @transform_2, window_bounds = array<i64: 1, 128>}, {transform_indices = @transform_3, window_bounds = array<i64: 8, 128>}]} {
    %c0 = arith.constant 0 : index
    %c0_0 = arith.constant 0 : index
    %0 = vector.load %arg1[%c0, %c0_0] : memref<8x128xbf16, #tpu.memory_space<vmem>>, vector<8x128xbf16>
    %1 = arith.extf %0 : vector<8x128xbf16> to vector<8x128xf32>
    %c0_1 = arith.constant 0 : index
    %c0_2 = arith.constant 0 : index
    %2 = vector.load %arg2[%c0_1, %c0_2] : memref<1x128xf32, #tpu.memory_space<vmem>>, vector<1x128xf32>
    %3 = vector.broadcast %2 : vector<1x128xf32> to vector<8x128xf32>
    %4 = arith.mulf %1, %3 : vector<8x128xf32>
    %c0_3 = arith.constant 0 : index
    %c0_4 = arith.constant 0 : index
    %5 = vector.load %arg3[%c0_3, %c0_4] : memref<1x128xf32, #tpu.memory_space<vmem>>, vector<1x128xf32>
    %6 = vector.broadcast %5 : vector<1x128xf32> to vector<8x128xf32>
    %7 = arith.addf %4, %6 : vector<8x128xf32>
    %cst = arith.constant 0.000000e+00 : f32
    %8 = vector.broadcast %cst : f32 to vector<8x128xf32>
    %9 = arith.maximumf %7, %8 : vector<8x128xf32>
    %10 = arith.truncf %9 : vector<8x128xf32> to vector<8x128xbf16>
    %c0_5 = arith.constant 0 : index
    %c0_6 = arith.constant 0 : index
    %11 = vector.load %arg4[%c0_5, %c0_6] : memref<8x128xbf16, #tpu.memory_space<vmem>>, vector<8x128xbf16>
    tpu.vector_store %arg4[%c0_5, %c0_6], %10 {strides = array<i32>} : memref<8x128xbf16, #tpu.memory_space<vmem>>, vector<8x128xbf16>,
    return
  }
  func.func @transform_0(%arg0: i32) -> (i32, i32) {
    %c0_i32 = arith.constant 0 : i32
    %c0_i32_0 = arith.constant 0 : i32
    return %arg0, %c0_i32 : i32, i32
  }
  func.func @transform_1(%arg0: i32) -> (i32, i32) {
    %c0_i32 = arith.constant 0 : i32
    %c0_i32_0 = arith.constant 0 : i32
    %c0_i32_1 = arith.constant 0 : i32
    return %c0_i32, %c0_i32_0 : i32, i32
  }
  func.func @transform_2(%arg0: i32) -> (i32, i32) {
    %c0_i32 = arith.constant 0 : i32
    %c0_i32_0 = arith.constant 0 : i32
    %c0_i32_1 = arith.constant 0 : i32
    return %c0_i32, %c0_i32_0 : i32, i32
  }
  func.func @transform_3(%arg0: i32) -> (i32, i32) {
    %c0_i32 = arith.constant 0 : i32
    %c0_i32_0 = arith.constant 0 : i32
    return %arg0, %c0_i32 : i32, i32
  }
}

module attributes {stable_mosaic.version = 11 : i64} {
  func.func @_upsample_mm_kernel(%arg0: i32, %arg1: i32, %arg2: memref<1x32x128xbf16, #tpu.memory_space<vmem>>, %arg3: memref<1x128x16xbf16, #tpu.memory_space<vmem>>, %arg4: memref<1x16xf32, #tpu.memory_space<vmem>>, %arg5: memref<1x32x16xbf16, #tpu.memory_space<vmem>>, %arg6: memref<1x1x2x16xf32, #tpu.memory_space<vmem>>) attributes {dimension_semantics = [#tpu.dimension_semantics<parallel>, #tpu.dimension_semantics<arbitrary>], iteration_bounds = array<i64: 4, 1>, scalar_prefetch = 0 : i64, scratch_operands = 0 : i64, tpu.core_type = #tpu.core_type<tc>, window_params = [{transform_indices = @transform_0, window_bounds = array<i64: 1, 32, 128>}, {transform_indices = @transform_1, window_bounds = array<i64: 1, 128, 16>}, {pipeline_mode = #tpu.pipeline_mode<synchronous>, transform_indices = @transform_2, window_bounds = array<i64: 1, 16>}, {transform_indices = @transform_3, window_bounds = array<i64: 1, 32, 16>}, {transform_indices = @transform_4, window_bounds = array<i64: 1, 1, 2, 16>}]} {
    %c0 = arith.constant 0 : index
    %c0_0 = arith.constant 0 : index
    %c0_1 = arith.constant 0 : index
    %0 = vector.load %arg2[%c0, %c0_0, %c0_1] : memref<1x32x128xbf16, #tpu.memory_space<vmem>>, vector<1x32x128xbf16>
    %1 = vector.shape_cast %0 : vector<1x32x128xbf16> to vector<32x128xbf16>
    %c0_2 = arith.constant 0 : index
    %c0_3 = arith.constant 0 : index
    %c0_4 = arith.constant 0 : index
    %2 = vector.load %arg3[%c0_2, %c0_3, %c0_4] : memref<1x128x16xbf16, #tpu.memory_space<vmem>>, vector<1x128x16xbf16>
    %3 = vector.shape_cast %2 : vector<1x128x16xbf16> to vector<128x16xbf16>
    %cst = arith.constant dense<0.000000e+00> : vector<32x16xf32>
    %4 = tpu.matmul %1, %3, %cst {dimension_numbers = #tpu.dot_dimension_numbers<[1], [0], [0], [1], [0, 0, 1, 1], [], []>} : vector<32x128xbf16>, vector<128x16xbf16>, vector<32x16xf32> -> vector<32x16xf32>
    %c0_5 = arith.constant 0 : index
    %c0_6 = arith.constant 0 : index
    %5 = vector.load %arg4[%c0_5, %c0_6] : memref<1x16xf32, #tpu.memory_space<vmem>>, vector<1x16xf32>
    %6 = vector.broadcast %5 : vector<1x16xf32> to vector<32x16xf32>
    %7 = arith.addf %4, %6 : vector<32x16xf32>
    %8 = arith.truncf %7 : vector<32x16xf32> to vector<32x16xbf16>
    %c0_7 = arith.constant 0 : index
    %c0_8 = arith.constant 0 : index
    %c0_9 = arith.constant 0 : index
    %9 = vector.load %arg5[%c0_7, %c0_8, %c0_9] : memref<1x32x16xbf16, #tpu.memory_space<vmem>>, vector<1x32x16xbf16>
    %10 = vector.shape_cast %9 : vector<1x32x16xbf16> to vector<32x16xbf16>
    %11 = vector.shape_cast %8 : vector<32x16xbf16> to vector<1x32x16xbf16>
    tpu.vector_store %arg5[%c0_7, %c0_8, %c0_9], %11 {strides = array<i32>} : memref<1x32x16xbf16, #tpu.memory_space<vmem>>, vector<1x32x16xbf16>,
    %cst_10 = arith.constant dense<0.000000e+00> : vector<16xf32>
    %12 = vector.multi_reduction <add>, %7, %cst_10 [0] : vector<32x16xf32> to vector<16xf32>
    %13 = vector.shape_cast %12 : vector<16xf32> to vector<1x16xf32>
    %c0_11 = arith.constant 0 : index
    %c0_12 = arith.constant 0 : index
    %c0_13 = arith.constant 0 : index
    %c0_14 = arith.constant 0 : index
    %14 = vector.load %arg6[%c0_11, %c0_12, %c0_13, %c0_14] : memref<1x1x2x16xf32, #tpu.memory_space<vmem>>, vector<1x1x1x16xf32>
    %15 = vector.shape_cast %14 : vector<1x1x1x16xf32> to vector<1x16xf32>
    %16 = vector.shape_cast %13 : vector<1x16xf32> to vector<1x1x1x16xf32>
    tpu.vector_store %arg6[%c0_11, %c0_12, %c0_13, %c0_14], %16 {strides = array<i32>} : memref<1x1x2x16xf32, #tpu.memory_space<vmem>>, vector<1x1x1x16xf32>,
    %17 = arith.mulf %7, %7 : vector<32x16xf32>
    %cst_15 = arith.constant dense<0.000000e+00> : vector<16xf32>
    %18 = vector.multi_reduction <add>, %17, %cst_15 [0] : vector<32x16xf32> to vector<16xf32>
    %19 = vector.shape_cast %18 : vector<16xf32> to vector<1x16xf32>
    %c0_16 = arith.constant 0 : index
    %c0_17 = arith.constant 0 : index
    %c1 = arith.constant 1 : index
    %c0_18 = arith.constant 0 : index
    %20 = vector.load %arg6[%c0_16, %c0_17, %c1, %c0_18] : memref<1x1x2x16xf32, #tpu.memory_space<vmem>>, vector<1x1x1x16xf32>
    %21 = vector.shape_cast %20 : vector<1x1x1x16xf32> to vector<1x16xf32>
    %22 = vector.shape_cast %19 : vector<1x16xf32> to vector<1x1x1x16xf32>
    tpu.vector_store %arg6[%c0_16, %c0_17, %c1, %c0_18], %22 {strides = array<i32>} : memref<1x1x2x16xf32, #tpu.memory_space<vmem>>, vector<1x1x1x16xf32>,
    return
  }
  func.func @transform_0(%arg0: i32, %arg1: i32) -> (i32, i32, i32) {
    %c0_i32 = arith.constant 0 : i32
    %c0_i32_0 = arith.constant 0 : i32
    return %arg0, %arg1, %c0_i32 : i32, i32, i32
  }
  func.func @transform_1(%arg0: i32, %arg1: i32) -> (i32, i32, i32) {
    %c0_i32 = arith.constant 0 : i32
    %c0_i32_0 = arith.constant 0 : i32
    %c0_i32_1 = arith.constant 0 : i32
    return %arg0, %c0_i32, %c0_i32_0 : i32, i32, i32
  }
  func.func @transform_2(%arg0: i32, %arg1: i32) -> (i32, i32) {
    %c0_i32 = arith.constant 0 : i32
    %c0_i32_0 = arith.constant 0 : i32
    %c0_i32_1 = arith.constant 0 : i32
    return %c0_i32, %c0_i32_0 : i32, i32
  }
  func.func @transform_3(%arg0: i32, %arg1: i32) -> (i32, i32, i32) {
    %c0_i32 = arith.constant 0 : i32
    %c0_i32_0 = arith.constant 0 : i32
    return %arg0, %arg1, %c0_i32 : i32, i32, i32
  }
  func.func @transform_4(%arg0: i32, %arg1: i32) -> (i32, i32, i32, i32) {
    %c0_i32 = arith.constant 0 : i32
    %c0_i32_0 = arith.constant 0 : i32
    %c0_i32_1 = arith.constant 0 : i32
    return %arg0, %arg1, %c0_i32, %c0_i32_0 : i32, i32, i32, i32
  }
}

module attributes {stable_mosaic.version = 11 : i64} {
  func.func @_scale_shift_relu_kernel(%arg0: i32, %arg1: memref<16x128xbf16, #tpu.memory_space<vmem>>, %arg2: memref<1x128xf32, #tpu.memory_space<vmem>>, %arg3: memref<1x128xf32, #tpu.memory_space<vmem>>, %arg4: memref<16x128xbf16, #tpu.memory_space<vmem>>) attributes {dimension_semantics = [#tpu.dimension_semantics<parallel>], iteration_bounds = array<i64: 1>, scalar_prefetch = 0 : i64, scratch_operands = 0 : i64, tpu.core_type = #tpu.core_type<tc>, window_params = [{transform_indices = @transform_0, window_bounds = array<i64: 16, 128>}, {pipeline_mode = #tpu.pipeline_mode<synchronous>, transform_indices = @transform_1, window_bounds = array<i64: 1, 128>}, {pipeline_mode = #tpu.pipeline_mode<synchronous>, transform_indices = @transform_2, window_bounds = array<i64: 1, 128>}, {transform_indices = @transform_3, window_bounds = array<i64: 16, 128>}]} {
    %c0 = arith.constant 0 : index
    %c0_0 = arith.constant 0 : index
    %0 = vector.load %arg1[%c0, %c0_0] : memref<16x128xbf16, #tpu.memory_space<vmem>>, vector<16x128xbf16>
    %1 = arith.extf %0 : vector<16x128xbf16> to vector<16x128xf32>
    %c0_1 = arith.constant 0 : index
    %c0_2 = arith.constant 0 : index
    %2 = vector.load %arg2[%c0_1, %c0_2] : memref<1x128xf32, #tpu.memory_space<vmem>>, vector<1x128xf32>
    %3 = vector.broadcast %2 : vector<1x128xf32> to vector<16x128xf32>
    %4 = arith.mulf %1, %3 : vector<16x128xf32>
    %c0_3 = arith.constant 0 : index
    %c0_4 = arith.constant 0 : index
    %5 = vector.load %arg3[%c0_3, %c0_4] : memref<1x128xf32, #tpu.memory_space<vmem>>, vector<1x128xf32>
    %6 = vector.broadcast %5 : vector<1x128xf32> to vector<16x128xf32>
    %7 = arith.addf %4, %6 : vector<16x128xf32>
    %cst = arith.constant 0.000000e+00 : f32
    %8 = vector.broadcast %cst : f32 to vector<16x128xf32>
    %9 = arith.maximumf %7, %8 : vector<16x128xf32>
    %10 = arith.truncf %9 : vector<16x128xf32> to vector<16x128xbf16>
    %c0_5 = arith.constant 0 : index
    %c0_6 = arith.constant 0 : index
    %11 = vector.load %arg4[%c0_5, %c0_6] : memref<16x128xbf16, #tpu.memory_space<vmem>>, vector<16x128xbf16>
    tpu.vector_store %arg4[%c0_5, %c0_6], %10 {strides = array<i32>} : memref<16x128xbf16, #tpu.memory_space<vmem>>, vector<16x128xbf16>,
    return
  }
  func.func @transform_0(%arg0: i32) -> (i32, i32) {
    %c0_i32 = arith.constant 0 : i32
    %c0_i32_0 = arith.constant 0 : i32
    return %arg0, %c0_i32 : i32, i32
  }
  func.func @transform_1(%arg0: i32) -> (i32, i32) {
    %c0_i32 = arith.constant 0 : i32
    %c0_i32_0 = arith.constant 0 : i32
    %c0_i32_1 = arith.constant 0 : i32
    return %c0_i32, %c0_i32_0 : i32, i32
  }
  func.func @transform_2(%arg0: i32) -> (i32, i32) {
    %c0_i32 = arith.constant 0 : i32
    %c0_i32_0 = arith.constant 0 : i32
    %c0_i32_1 = arith.constant 0 : i32
    return %c0_i32, %c0_i32_0 : i32, i32
  }
  func.func @transform_3(%arg0: i32) -> (i32, i32) {
    %c0_i32 = arith.constant 0 : i32
    %c0_i32_0 = arith.constant 0 : i32
    return %arg0, %c0_i32 : i32, i32
  }
}

module attributes {stable_mosaic.version = 11 : i64} {
  func.func @_upsample_mm_kernel(%arg0: i32, %arg1: i32, %arg2: memref<1x128x64xbf16, #tpu.memory_space<vmem>>, %arg3: memref<1x64x8xbf16, #tpu.memory_space<vmem>>, %arg4: memref<1x8xf32, #tpu.memory_space<vmem>>, %arg5: memref<1x128x8xbf16, #tpu.memory_space<vmem>>, %arg6: memref<1x1x2x8xf32, #tpu.memory_space<vmem>>) attributes {dimension_semantics = [#tpu.dimension_semantics<parallel>, #tpu.dimension_semantics<arbitrary>], iteration_bounds = array<i64: 4, 1>, scalar_prefetch = 0 : i64, scratch_operands = 0 : i64, tpu.core_type = #tpu.core_type<tc>, window_params = [{transform_indices = @transform_0, window_bounds = array<i64: 1, 128, 64>}, {transform_indices = @transform_1, window_bounds = array<i64: 1, 64, 8>}, {pipeline_mode = #tpu.pipeline_mode<synchronous>, transform_indices = @transform_2, window_bounds = array<i64: 1, 8>}, {transform_indices = @transform_3, window_bounds = array<i64: 1, 128, 8>}, {transform_indices = @transform_4, window_bounds = array<i64: 1, 1, 2, 8>}]} {
    %c0 = arith.constant 0 : index
    %c0_0 = arith.constant 0 : index
    %c0_1 = arith.constant 0 : index
    %0 = vector.load %arg2[%c0, %c0_0, %c0_1] : memref<1x128x64xbf16, #tpu.memory_space<vmem>>, vector<1x128x64xbf16>
    %1 = vector.shape_cast %0 : vector<1x128x64xbf16> to vector<128x64xbf16>
    %c0_2 = arith.constant 0 : index
    %c0_3 = arith.constant 0 : index
    %c0_4 = arith.constant 0 : index
    %2 = vector.load %arg3[%c0_2, %c0_3, %c0_4] : memref<1x64x8xbf16, #tpu.memory_space<vmem>>, vector<1x64x8xbf16>
    %3 = vector.shape_cast %2 : vector<1x64x8xbf16> to vector<64x8xbf16>
    %cst = arith.constant dense<0.000000e+00> : vector<128x8xf32>
    %4 = tpu.matmul %1, %3, %cst {dimension_numbers = #tpu.dot_dimension_numbers<[1], [0], [0], [1], [0, 0, 1, 1], [], []>} : vector<128x64xbf16>, vector<64x8xbf16>, vector<128x8xf32> -> vector<128x8xf32>
    %c0_5 = arith.constant 0 : index
    %c0_6 = arith.constant 0 : index
    %5 = vector.load %arg4[%c0_5, %c0_6] : memref<1x8xf32, #tpu.memory_space<vmem>>, vector<1x8xf32>
    %6 = vector.broadcast %5 : vector<1x8xf32> to vector<128x8xf32>
    %7 = arith.addf %4, %6 : vector<128x8xf32>
    %8 = arith.truncf %7 : vector<128x8xf32> to vector<128x8xbf16>
    %c0_7 = arith.constant 0 : index
    %c0_8 = arith.constant 0 : index
    %c0_9 = arith.constant 0 : index
    %9 = vector.load %arg5[%c0_7, %c0_8, %c0_9] : memref<1x128x8xbf16, #tpu.memory_space<vmem>>, vector<1x128x8xbf16>
    %10 = vector.shape_cast %9 : vector<1x128x8xbf16> to vector<128x8xbf16>
    %11 = vector.shape_cast %8 : vector<128x8xbf16> to vector<1x128x8xbf16>
    tpu.vector_store %arg5[%c0_7, %c0_8, %c0_9], %11 {strides = array<i32>} : memref<1x128x8xbf16, #tpu.memory_space<vmem>>, vector<1x128x8xbf16>,
    %cst_10 = arith.constant dense<0.000000e+00> : vector<8xf32>
    %12 = vector.multi_reduction <add>, %7, %cst_10 [0] : vector<128x8xf32> to vector<8xf32>
    %13 = vector.shape_cast %12 : vector<8xf32> to vector<1x8xf32>
    %c0_11 = arith.constant 0 : index
    %c0_12 = arith.constant 0 : index
    %c0_13 = arith.constant 0 : index
    %c0_14 = arith.constant 0 : index
    %14 = vector.load %arg6[%c0_11, %c0_12, %c0_13, %c0_14] : memref<1x1x2x8xf32, #tpu.memory_space<vmem>>, vector<1x1x1x8xf32>
    %15 = vector.shape_cast %14 : vector<1x1x1x8xf32> to vector<1x8xf32>
    %16 = vector.shape_cast %13 : vector<1x8xf32> to vector<1x1x1x8xf32>
    tpu.vector_store %arg6[%c0_11, %c0_12, %c0_13, %c0_14], %16 {strides = array<i32>} : memref<1x1x2x8xf32, #tpu.memory_space<vmem>>, vector<1x1x1x8xf32>,
    %17 = arith.mulf %7, %7 : vector<128x8xf32>
    %cst_15 = arith.constant dense<0.000000e+00> : vector<8xf32>
    %18 = vector.multi_reduction <add>, %17, %cst_15 [0] : vector<128x8xf32> to vector<8xf32>
    %19 = vector.shape_cast %18 : vector<8xf32> to vector<1x8xf32>
    %c0_16 = arith.constant 0 : index
    %c0_17 = arith.constant 0 : index
    %c1 = arith.constant 1 : index
    %c0_18 = arith.constant 0 : index
    %20 = vector.load %arg6[%c0_16, %c0_17, %c1, %c0_18] : memref<1x1x2x8xf32, #tpu.memory_space<vmem>>, vector<1x1x1x8xf32>
    %21 = vector.shape_cast %20 : vector<1x1x1x8xf32> to vector<1x8xf32>
    %22 = vector.shape_cast %19 : vector<1x8xf32> to vector<1x1x1x8xf32>
    tpu.vector_store %arg6[%c0_16, %c0_17, %c1, %c0_18], %22 {strides = array<i32>} : memref<1x1x2x8xf32, #tpu.memory_space<vmem>>, vector<1x1x1x8xf32>,
    return
  }
  func.func @transform_0(%arg0: i32, %arg1: i32) -> (i32, i32, i32) {
    %c0_i32 = arith.constant 0 : i32
    %c0_i32_0 = arith.constant 0 : i32
    return %arg0, %arg1, %c0_i32 : i32, i32, i32
  }
  func.func @transform_1(%arg0: i32, %arg1: i32) -> (i32, i32, i32) {
    %c0_i32 = arith.constant 0 : i32
    %c0_i32_0 = arith.constant 0 : i32
    %c0_i32_1 = arith.constant 0 : i32
    return %arg0, %c0_i32, %c0_i32_0 : i32, i32, i32
  }
  func.func @transform_2(%arg0: i32, %arg1: i32) -> (i32, i32) {
    %c0_i32 = arith.constant 0 : i32
    %c0_i32_0 = arith.constant 0 : i32
    %c0_i32_1 = arith.constant 0 : i32
    return %c0_i32, %c0_i32_0 : i32, i32
  }
  func.func @transform_3(%arg0: i32, %arg1: i32) -> (i32, i32, i32) {
    %c0_i32 = arith.constant 0 : i32
    %c0_i32_0 = arith.constant 0 : i32
    return %arg0, %arg1, %c0_i32 : i32, i32, i32
  }
  func.func @transform_4(%arg0: i32, %arg1: i32) -> (i32, i32, i32, i32) {
    %c0_i32 = arith.constant 0 : i32
    %c0_i32_0 = arith.constant 0 : i32
    %c0_i32_1 = arith.constant 0 : i32
    return %arg0, %arg1, %c0_i32, %c0_i32_0 : i32, i32, i32, i32
  }
}

module attributes {stable_mosaic.version = 11 : i64} {
  func.func @_scale_shift_relu_kernel(%arg0: i32, %arg1: memref<32x128xbf16, #tpu.memory_space<vmem>>, %arg2: memref<1x128xf32, #tpu.memory_space<vmem>>, %arg3: memref<1x128xf32, #tpu.memory_space<vmem>>, %arg4: memref<32x128xbf16, #tpu.memory_space<vmem>>) attributes {dimension_semantics = [#tpu.dimension_semantics<parallel>], iteration_bounds = array<i64: 1>, scalar_prefetch = 0 : i64, scratch_operands = 0 : i64, tpu.core_type = #tpu.core_type<tc>, window_params = [{transform_indices = @transform_0, window_bounds = array<i64: 32, 128>}, {pipeline_mode = #tpu.pipeline_mode<synchronous>, transform_indices = @transform_1, window_bounds = array<i64: 1, 128>}, {pipeline_mode = #tpu.pipeline_mode<synchronous>, transform_indices = @transform_2, window_bounds = array<i64: 1, 128>}, {transform_indices = @transform_3, window_bounds = array<i64: 32, 128>}]} {
    %c0 = arith.constant 0 : index
    %c0_0 = arith.constant 0 : index
    %0 = vector.load %arg1[%c0, %c0_0] : memref<32x128xbf16, #tpu.memory_space<vmem>>, vector<32x128xbf16>
    %1 = arith.extf %0 : vector<32x128xbf16> to vector<32x128xf32>
    %c0_1 = arith.constant 0 : index
    %c0_2 = arith.constant 0 : index
    %2 = vector.load %arg2[%c0_1, %c0_2] : memref<1x128xf32, #tpu.memory_space<vmem>>, vector<1x128xf32>
    %3 = vector.broadcast %2 : vector<1x128xf32> to vector<32x128xf32>
    %4 = arith.mulf %1, %3 : vector<32x128xf32>
    %c0_3 = arith.constant 0 : index
    %c0_4 = arith.constant 0 : index
    %5 = vector.load %arg3[%c0_3, %c0_4] : memref<1x128xf32, #tpu.memory_space<vmem>>, vector<1x128xf32>
    %6 = vector.broadcast %5 : vector<1x128xf32> to vector<32x128xf32>
    %7 = arith.addf %4, %6 : vector<32x128xf32>
    %cst = arith.constant 0.000000e+00 : f32
    %8 = vector.broadcast %cst : f32 to vector<32x128xf32>
    %9 = arith.maximumf %7, %8 : vector<32x128xf32>
    %10 = arith.truncf %9 : vector<32x128xf32> to vector<32x128xbf16>
    %c0_5 = arith.constant 0 : index
    %c0_6 = arith.constant 0 : index
    %11 = vector.load %arg4[%c0_5, %c0_6] : memref<32x128xbf16, #tpu.memory_space<vmem>>, vector<32x128xbf16>
    tpu.vector_store %arg4[%c0_5, %c0_6], %10 {strides = array<i32>} : memref<32x128xbf16, #tpu.memory_space<vmem>>, vector<32x128xbf16>,
    return
  }
  func.func @transform_0(%arg0: i32) -> (i32, i32) {
    %c0_i32 = arith.constant 0 : i32
    %c0_i32_0 = arith.constant 0 : i32
    return %arg0, %c0_i32 : i32, i32
  }
  func.func @transform_1(%arg0: i32) -> (i32, i32) {
    %c0_i32 = arith.constant 0 : i32
    %c0_i32_0 = arith.constant 0 : i32
    %c0_i32_1 = arith.constant 0 : i32
    return %c0_i32, %c0_i32_0 : i32, i32
  }
  func.func @transform_2(%arg0: i32) -> (i32, i32) {
    %c0_i32 = arith.constant 0 : i32
    %c0_i32_0 = arith.constant 0 : i32
    %c0_i32_1 = arith.constant 0 : i32
    return %c0_i32, %c0_i32_0 : i32, i32
  }
  func.func @transform_3(%arg0: i32) -> (i32, i32) {
    %c0_i32 = arith.constant 0 : i32
    %c0_i32_0 = arith.constant 0 : i32
    return %arg0, %c0_i32 : i32, i32
  }
}

module attributes {stable_mosaic.version = 11 : i64} {
  func.func @_conv1x1_nchw_kernel(%arg0: i32, %arg1: memref<1x256x8xbf16, #tpu.memory_space<vmem>>, %arg2: memref<3x8xbf16, #tpu.memory_space<vmem>>, %arg3: memref<3x1xf32, #tpu.memory_space<vmem>>, %arg4: memref<1x3x256xf32, #tpu.memory_space<vmem>>) attributes {dimension_semantics = [#tpu.dimension_semantics<parallel>], iteration_bounds = array<i64: 2>, scalar_prefetch = 0 : i64, scratch_operands = 0 : i64, tpu.core_type = #tpu.core_type<tc>, window_params = [{transform_indices = @transform_0, window_bounds = array<i64: 1, 256, 8>}, {pipeline_mode = #tpu.pipeline_mode<synchronous>, transform_indices = @transform_1, window_bounds = array<i64: 3, 8>}, {pipeline_mode = #tpu.pipeline_mode<synchronous>, transform_indices = @transform_2, window_bounds = array<i64: 3, 1>}, {transform_indices = @transform_3, window_bounds = array<i64: 1, 3, 256>}]} {
    %c0 = arith.constant 0 : index
    %c0_0 = arith.constant 0 : index
    %0 = vector.load %arg2[%c0, %c0_0] : memref<3x8xbf16, #tpu.memory_space<vmem>>, vector<3x8xbf16>
    %c0_1 = arith.constant 0 : index
    %c0_2 = arith.constant 0 : index
    %c0_3 = arith.constant 0 : index
    %1 = vector.load %arg1[%c0_1, %c0_2, %c0_3] : memref<1x256x8xbf16, #tpu.memory_space<vmem>>, vector<1x256x8xbf16>
    %2 = vector.shape_cast %1 : vector<1x256x8xbf16> to vector<256x8xbf16>
    %cst = arith.constant dense<0.000000e+00> : vector<3x256xf32>
    %3 = tpu.matmul %0, %2, %cst {dimension_numbers = #tpu.dot_dimension_numbers<[1], [1], [0], [0], [0, 0, 1, 0], [], []>} : vector<3x8xbf16>, vector<256x8xbf16>, vector<3x256xf32> -> vector<3x256xf32>
    %c0_4 = arith.constant 0 : index
    %c0_5 = arith.constant 0 : index
    %4 = vector.load %arg3[%c0_4, %c0_5] : memref<3x1xf32, #tpu.memory_space<vmem>>, vector<3x1xf32>
    %5 = vector.broadcast %4 : vector<3x1xf32> to vector<3x256xf32>
    %6 = arith.addf %3, %5 : vector<3x256xf32>
    %c0_6 = arith.constant 0 : index
    %c0_7 = arith.constant 0 : index
    %c0_8 = arith.constant 0 : index
    %7 = vector.load %arg4[%c0_6, %c0_7, %c0_8] : memref<1x3x256xf32, #tpu.memory_space<vmem>>, vector<1x3x256xf32>
    %8 = vector.shape_cast %7 : vector<1x3x256xf32> to vector<3x256xf32>
    %9 = vector.shape_cast %6 : vector<3x256xf32> to vector<1x3x256xf32>
    tpu.vector_store %arg4[%c0_6, %c0_7, %c0_8], %9 {strides = array<i32>} : memref<1x3x256xf32, #tpu.memory_space<vmem>>, vector<1x3x256xf32>,
    return
  }
  func.func @transform_0(%arg0: i32) -> (i32, i32, i32) {
    %c0_i32 = arith.constant 0 : i32
    %c0_i32_0 = arith.constant 0 : i32
    %c0_i32_1 = arith.constant 0 : i32
    return %arg0, %c0_i32, %c0_i32_0 : i32, i32, i32
  }
  func.func @transform_1(%arg0: i32) -> (i32, i32) {
    %c0_i32 = arith.constant 0 : i32
    %c0_i32_0 = arith.constant 0 : i32
    %c0_i32_1 = arith.constant 0 : i32
    return %c0_i32, %c0_i32_0 : i32, i32
  }
  func.func @transform_2(%arg0: i32) -> (i32, i32) {
    %c0_i32 = arith.constant 0 : i32
    %c0_i32_0 = arith.constant 0 : i32
    %c0_i32_1 = arith.constant 0 : i32
    return %c0_i32, %c0_i32_0 : i32, i32
  }
  func.func @transform_3(%arg0: i32) -> (i32, i32, i32) {
    %c0_i32 = arith.constant 0 : i32
    %c0_i32_0 = arith.constant 0 : i32
    %c0_i32_1 = arith.constant 0 : i32
    return %arg0, %c0_i32, %c0_i32_0 : i32, i32, i32
  }
}

</mosaic_0001>

<llo_original>
// kernel: _forward_impl.8
$region0: #{_forward_impl.8}
  #allocation0 [shape = 'u32[]', space=smem, size = 0x4, offset = 0x4, fixed_abs, tag = 'smem constant byte address 0x4 - core index']
  #allocation1 [shape = 'u32[72,128]{1,0:T(1,128)}', space=vmem, size = 0x9000, scoped, tag = 'internal scratch']
  %s0 = inlined_call_operand.vmem [shape: bf16[8,16], index: 0, kind: input, shape index: {}]
  %s1 = inlined_call_operand.vmem [shape: bf16[16,64], index: 1, kind: input, shape index: {}]
  %s2 = inlined_call_operand.vmem [shape: f32[1,64], index: 2, kind: input, shape index: {}]
  %s3 = inlined_call_operand.vmem [shape: bf16[8,64], index: 3, kind: output, shape index: {}]
  %s4 = sld [smem:[#allocation0]]
  $region22: #{_forward_impl.8} parent=0
    _
  %s6 = ssub.s32 1, %s4
  %s7 = scalar_select 0, %s6, %s4
  // Predicated region
  $region2: #{_forward_impl.8} parent=0 // pred_check
    _
  $region3: #{_forward_impl.8} parent=0 // pred_check_branch
    %9 = sbr.rel (0) target = $region5
  $region4: #{_forward_impl.8} parent=0 // pred_region
    _
  $region5: #{_forward_impl.8} parent=0 // pred_fallthru
    _
  // Predicated region
  $region6: #{_forward_impl.8} parent=0 // pred_check
    _
  $region7: #{_forward_impl.8} parent=0 // pred_check_branch
    %11 = sbr.rel (0) target = $region9
  $region8: #{_forward_impl.8} parent=0 // pred_region
    _
  $region9: #{_forward_impl.8} parent=0 // pred_fallthru
    _
  // Predicated region
  $region10: #{_forward_impl.8} parent=0 // pred_check
    _
  $region11: #{_forward_impl.8} parent=0 // pred_check_branch
    %13 = sbr.rel (0) target = $region13
  $region12: #{_forward_impl.8} parent=0 // pred_region
    _
  $region13: #{_forward_impl.8} parent=0 // pred_fallthru
    _
  %v15 = vld [vmem:[%s0] sm:$0xf]
  %v16 = vld [vmem:[%s1] sm:$0xf]
  %v17 = vld [vmem:[%s1 + $0x4] sm:$0xf]
  %v18 = vld [vmem:[%s2] sm:$0x1]
  %v20 = vperm.slane %v18, 0
  %v24 = vunpack.c.l.b16 %v16
  %v25 = vunpack.c.l.b16 %v17
  %v26 = vpack.c.b16 %v25, %v24
  %vm28 = vcmask 130048
  %v30 = vsel %vm28, %v15, 0
  %32 = vmatpush.bf16.msra.mxu0 0
  %33 = vmatpush.bf16.msra.mxu0 0
  %34 = vmatpush.bf16.msra.mxu0 0
  %35 = vmatpush.bf16.msra.mxu0 0
  %36 = vmatpush.bf16.msra.mxu0 0
  %37 = vmatpush.bf16.msra.mxu0 0
  %38 = vmatpush.bf16.msra.mxu0 0
  %39 = vmatpush.bf16.msra.mxu0 %v26
  %40 = vmatmul.bf16.gmra.mxu0 %v30
  %v41 = vpop.f32.mrf.mxu0
  %v42 = vadd.f32 %v20, %v41
  %v43 = vpop.f32.mrf.mxu0
  %44 = vdwg.mxu0
  %v45 = vpack.c.bf16 %v42, %v42
  %vm46 = vcmask 519168
  %47 = vst.msk [vmem:[%s3] sm:$0xf] %vm46, %v45
  // Predicated region
  $region14: #{_forward_impl.8} parent=0 // pred_check
    _
  $region15: #{_forward_impl.8} parent=0 // pred_check_branch
    %49 = sbr.rel (0) target = $region17
  $region16: #{_forward_impl.8} parent=0 // pred_region
    _
  $region17: #{_forward_impl.8} parent=0 // pred_fallthru
    _
  // Predicated region
  $region18: #{_forward_impl.8} parent=0 // pred_check
    _
  $region19: #{_forward_impl.8} parent=0 // pred_check_branch
    %51 = sbr.rel (0) target = $region21
  $region20: #{_forward_impl.8} parent=0 // pred_region
    _
  $region21: #{_forward_impl.8} parent=0 // pred_fallthru
    _

// kernel: _forward_impl.9
$region0: #{_forward_impl.9}
  #allocation0 [shape = 'u32[]', space=smem, size = 0x4, offset = 0x4, fixed_abs, tag = 'smem constant byte address 0x4 - core index']
  #allocation1 [shape = 'u32[72,128]{1,0:T(1,128)}', space=vmem, size = 0x9000, scoped, tag = 'internal scratch']
  %s0 = inlined_call_operand.vmem [shape: bf16[4,8,256], index: 0, kind: input, shape index: {}]
  %s1 = inlined_call_operand.vmem [shape: bf16[4,256,32], index: 1, kind: input, shape index: {}]
  %s2 = inlined_call_operand.vmem [shape: f32[1,32], index: 2, kind: input, shape index: {}]
  %s3 = inlined_call_operand.vmem [shape: bf16[4,8,32], index: 3, kind: output, shape index: {0}]
  %s4 = inlined_call_operand.vmem [shape: f32[4,1,2,32], index: 4, kind: output, shape index: {1}]
  %5 = xla_tuple %s3, %s4
  %s6 = sld [smem:[#allocation0]]
  $region53: #{_forward_impl.9} parent=0
    _
  %s8 = ssub.s32 1, %s6
  %s9 = scalar_select 0, %s8, %s6
  loop: start=0, step=1, limit=6
  $region2: #{_forward_impl.9} parent=0 // loop_pre_header
    _
  $region3: #{_forward_impl.9} parent=0 // loop_header
    %s11 = sphi 0, %s15
    %p12 = scmp.ge.s32.totalorder %s11, 6
    %s18 = sphi 0, %s30
    %s19 = sphi 0, %s26
    %s20 = sphi 0, %s18
    %s21 = sphi 0, %s19
    %s22 = sphi 0, %s20
    %s23 = sphi 0, %s21
    %s35 = sphi 0, %s37
    %s38 = sphi 0, %s35
    %s39 = sphi 0, %s38
    %s55 = sphi 0, %s39
    %s61 = sphi 0, %s63
    %s64 = sphi 0, %s61
    %s65 = sphi 0, %s64
    %s81 = sphi 0, %s65
    %s85 = sphi 0, %s85
    %s87 = sphi 0, %s85
    %s88 = sphi 0, %s87
    %s102 = sphi 0, %s88
    %s110 = sphi 0, %s112
    %s113 = sphi 0, %s110
    %s114 = sphi 0, %s113
    %s130 = sphi 0, %s114
    %s138 = sphi 0, %s140
    %s141 = sphi 0, %s138
    %s142 = sphi 0, %s141
    %s158 = sphi 0, %s142
  $region4: #{_forward_impl.9} parent=0 // loop_header_branch
    %14 = sbr.rel (%p12) target = $region8
  $region5: #{_forward_impl.9} parent=0 // loop_body
    %s16 = ssub.s32 %s11, 1
    %s17 = ssub.s32 %s11, 2
    %s24 = sadd.s32 1, %s19
    %p25 = scmp.ge.s32.totalorder %s24, 1
    %s26 = scalar_select %p25, 0, %s24
    %s27 = sadd.s32 1, %s18
    %s28 = scalar_select %p25, %s27, %s18
    %p29 = scmp.ge.s32.totalorder %s28, 4
    %s30 = scalar_select %p29, 0, %s28
    %s31 = ssub.s32 %s18, %s30
    %s32 = ssub.s32 %s19, %s26
    %s33 = sor.u32 %s31, %s32
    %p34 = scmp.eq.s32.totalorder %s33, 0
    %s36 = sadd.s32 %s35, 1
    %s37 = scalar_select %p34, %s35, %s36
    %p40 = pneg %p34
    %p41 = scmp.eq.s32.totalorder %s11, 3
    %p42 = por %p40, %p41
    %p43 = scmp.ne.s32.totalorder %s35, %s38
    %p44 = scmp.eq.s32.totalorder %s11, 0
    %p45 = por %p43, %p44
    %p46 = scmp.ne.s32.totalorder %s35, %s38
    %p47 = scmp.eq.s32.totalorder %s16, 3
    %p48 = por %p46, %p47
    %p49 = scmp.ne.s32.totalorder %s38, %s39
    %p50 = scmp.eq.s32.totalorder %s16, 0
    %p51 = por %p49, %p50
    %p52 = scmp.ne.s32.totalorder %s38, %s39
    %p53 = scmp.eq.s32.totalorder %s17, 3
    %p54 = por %p52, %p53
    %p56 = scmp.ne.s32.totalorder %s39, %s55
    %p57 = scmp.eq.s32.totalorder %s17, 0
    %p58 = por %p56, %p57
    %s59 = ssub.s32 %s18, %s30
    %p60 = scmp.eq.s32.totalorder %s59, 0
    %s62 = sadd.s32 %s61, 1
    %s63 = scalar_select %p60, %s61, %s62
    %p66 = pneg %p60
    %p67 = scmp.eq.s32.totalorder %s11, 3
    %p68 = por %p66, %p67
    %p69 = scmp.ne.s32.totalorder %s61, %s64
    %p70 = scmp.eq.s32.totalorder %s11, 0
    %p71 = por %p69, %p70
    %p72 = scmp.ne.s32.totalorder %s61, %s64
    %p73 = scmp.eq.s32.totalorder %s16, 3
    %p74 = por %p72, %p73
    %p75 = scmp.ne.s32.totalorder %s64, %s65
    %p76 = scmp.eq.s32.totalorder %s16, 0
    %p77 = por %p75, %p76
    %p78 = scmp.ne.s32.totalorder %s64, %s65
    %p79 = scmp.eq.s32.totalorder %s17, 3
    %p80 = por %p78, %p79
    %p82 = scmp.ne.s32.totalorder %s65, %s81
    %p83 = scmp.eq.s32.totalorder %s17, 0
    %p84 = por %p82, %p83
    %s86 = sadd.s32 %s85, 1
    %p89 = scmp.eq.s32.totalorder %s11, 3
    %p90 = scmp.ne.s32.totalorder %s85, %s87
    %p91 = scmp.eq.s32.totalorder %s11, 0
    %p92 = por %p90, %p91
    %p93 = scmp.ne.s32.totalorder %s85, %s87
    %p94 = scmp.eq.s32.totalorder %s16, 3
    %p95 = por %p93, %p94
    %p96 = scmp.ne.s32.totalorder %s87, %s88
    %p97 = scmp.eq.s32.totalorder %s16, 0
    %p98 = por %p96, %p97
    %p99 = scmp.ne.s32.totalorder %s87, %s88
    %p100 = scmp.eq.s32.totalorder %s17, 3
    %p101 = por %p99, %p100
    %p103 = scmp.ne.s32.totalorder %s88, %s102
    %p104 = scmp.eq.s32.totalorder %s17, 0
    %p105 = por %p103, %p104
    %s106 = ssub.s32 %s18, %s30
    %s107 = ssub.s32 %s19, %s26
    %s108 = sor.u32 %s106, %s107
    %p109 = scmp.eq.s32.totalorder %s108, 0
    %s111 = sadd.s32 %s110, 1
    %s112 = scalar_select %p109, %s110, %s111
    %p115 = pneg %p109
    %p116 = scmp.eq.s32.totalorder %s11, 3
    %p117 = por %p115, %p116
    %p118 = scmp.ne.s32.totalorder %s110, %s113
    %p119 = scmp.eq.s32.totalorder %s11, 0
    %p120 = por %p118, %p119
    %p121 = scmp.ne.s32.totalorder %s110, %s113
    %p122 = scmp.eq.s32.totalorder %s16, 3
    %p123 = por %p121, %p122
    %p124 = scmp.ne.s32.totalorder %s113, %s114
    %p125 = scmp.eq.s32.totalorder %s16, 0
    %p126 = por %p124, %p125
    %p127 = scmp.ne.s32.totalorder %s113, %s114
    %p128 = scmp.eq.s32.totalorder %s17, 3
    %p129 = por %p127, %p128
    %p131 = scmp.ne.s32.totalorder %s114, %s130
    %p132 = scmp.eq.s32.totalorder %s17, 0
    %p133 = por %p131, %p132
    %s134 = ssub.s32 %s18, %s30
    %s135 = ssub.s32 %s19, %s26
    %s136 = sor.u32 %s134, %s135
    %p137 = scmp.eq.s32.totalorder %s136, 0
    %s139 = sadd.s32 %s138, 1
    %s140 = scalar_select %p137, %s138, %s139
    %p143 = pneg %p137
    %p144 = scmp.eq.s32.totalorder %s11, 3
    %p145 = por %p143, %p144
    %p146 = scmp.ne.s32.totalorder %s138, %s141
    %p147 = scmp.eq.s32.totalorder %s11, 0
    %p148 = por %p146, %p147
    %p149 = scmp.ne.s32.totalorder %s138, %s141
    %p150 = scmp.eq.s32.totalorder %s16, 3
    %p151 = por %p149, %p150
    %p152 = scmp.ne.s32.totalorder %s141, %s142
    %p153 = scmp.eq.s32.totalorder %s16, 0
    %p154 = por %p152, %p153
    %p155 = scmp.ne.s32.totalorder %s141, %s142
    %p156 = scmp.eq.s32.totalorder %s17, 3
    %p157 = por %p155, %p156
    %p159 = scmp.ne.s32.totalorder %s142, %s158
    %p160 = scmp.eq.s32.totalorder %s17, 0
    %p161 = por %p159, %p160
    %p162 = scmp.le.s32.totalorder 1, %s11
    %p163 = scmp.lt.s32.totalorder %s11, 5
    %p164 = pnand %p162, %p163
    %p165 = pneg %p164
    // Predicated region
    $region9: #{_forward_impl.9} parent=5 // pred_check
      _
    $region10: #{_forward_impl.9} parent=5 // pred_check_branch
      %167 = sbr.rel (%p164) target = $region12
    $region11: #{_forward_impl.9} parent=5 // pred_region
      %s168 = ssub.s32 %s11, 1
      // Predicated region
      $region13: #{_forward_impl.9} parent=11 // pred_check
        %p169 = pneg %p98
      $region14: #{_forward_impl.9} parent=11 // pred_check_branch
        %171 = sbr.rel (%p169) target = $region16
      $region15: #{_forward_impl.9} parent=11 // pred_region
        _
      $region16: #{_forward_impl.9} parent=11 // pred_fallthru
        _
    $region12: #{_forward_impl.9} parent=5 // pred_fallthru
      _
    %p172 = scmp.lt.s32.totalorder %s11, 4
    // Predicated region
    $region17: #{_forward_impl.9} parent=5 // pred_check
      %p173 = pneg %p172
    $region18: #{_forward_impl.9} parent=5 // pred_check_branch
      %175 = sbr.rel (%p173) target = $region20
    $region19: #{_forward_impl.9} parent=5 // pred_region
      // Predicated region
      $region21: #{_forward_impl.9} parent=19 // pred_check
        %p176 = pneg %p45
      $region22: #{_forward_impl.9} parent=19 // pred_check_branch
        %178 = sbr.rel (%p176) target = $region24
      $region23: #{_forward_impl.9} parent=19 // pred_region
        %p179 = scmp.lt.s32.totalorder %s18, 3
        %s180 = scalar_select %p179, %s18, 3
        %p181 = scmp.lt.s32.totalorder %s19, 0
        %s182 = scalar_select %p181, %s19, 0
        %s183 = smul.addr %s182, 2
        %s184 = smul.addr %s180, 2
        %s185 = sadd.s32 %s183, %s184
        %s186 = smul.addr %s185, 4
        %s187 = scalar_lea.vmem %s0, %s186
      $region24: #{_forward_impl.9} parent=19 // pred_fallthru
        _
      // Predicated region
      $region25: #{_forward_impl.9} parent=19 // pred_check
        %p188 = pneg %p71
      $region26: #{_forward_impl.9} parent=19 // pred_check_branch
        %190 = sbr.rel (%p188) target = $region28
      $region27: #{_forward_impl.9} parent=19 // pred_region
        %p191 = scmp.lt.s32.totalorder %s18, 3
        %s192 = scalar_select %p191, %s18, 3
        %s193 = smul.addr %s192, 32
        %s194 = smul.addr %s193, 4
        %s195 = scalar_lea.vmem %s1, %s194
      $region28: #{_forward_impl.9} parent=19 // pred_fallthru
        _
    $region20: #{_forward_impl.9} parent=5 // pred_fallthru
      _
    %p196 = scmp.le.s32.totalorder 1, %s11
    %p197 = scmp.lt.s32.totalorder %s11, 5
    %p198 = pnand %p196, %p197
    %p199 = pneg %p198
    // Predicated region
    $region29: #{_forward_impl.9} parent=5 // pred_check
      _
    $region30: #{_forward_impl.9} parent=5 // pred_check_branch
      %201 = sbr.rel (%p198) target = $region32
    $region31: #{_forward_impl.9} parent=5 // pred_region
      %s202 = ssub.s32 %s11, 1
      %p203 = scmp.lt.s32.totalorder %s20, 3
      %s204 = scalar_select %p203, %s20, 3
      %p205 = scmp.lt.s32.totalorder %s21, 0
      %s206 = scalar_select %p205, %s21, 0
      %s207 = smul.addr %s206, 2
      %s208 = smul.addr %s204, 2
      %s209 = sadd.s32 %s207, %s208
      %s210 = smul.addr %s209, 4
      %s211 = scalar_lea.vmem %s0, %s210
      %p212 = pneg %p51
      %p213 = pneg %p48
      %p214 = scmp.lt.s32.totalorder %s20, 3
      %s215 = scalar_select %p214, %s20, 3
      %s216 = smul.addr %s215, 32
      %s217 = smul.addr %s216, 4
      %s218 = scalar_lea.vmem %s1, %s217
      %p219 = pneg %p77
      %p220 = pneg %p74
      %p221 = pneg %p98
      %p222 = pneg %p95
      %p223 = pneg %p126
      %p224 = pneg %p123
      %p225 = scmp.lt.s32.totalorder %s20, 3
      %s226 = scalar_select %p225, %s20, 3
      %p227 = scmp.lt.s32.totalorder %s21, 0
      %s228 = scalar_select %p227, %s21, 0
      %s229 = sadd.s32 %s228, %s226
      %s230 = smul.addr %s229, 4
      %s231 = scalar_lea.vmem %s3, %s230
      %p232 = pneg %p154
      %p233 = pneg %p151
      %p234 = scmp.lt.s32.totalorder %s20, 3
      %s235 = scalar_select %p234, %s20, 3
      %p236 = scmp.lt.s32.totalorder %s21, 0
      %s237 = scalar_select %p236, %s21, 0
      %s238 = sadd.s32 %s237, %s235
      %s239 = smul.addr %s238, 2
      %s240 = scalar_lea.vmem %s4, %s239
      %p241 = scmp.lt.s32.totalorder %s20, 3
      %s242 = scalar_select %p241, %s20, 3
      %p243 = scmp.lt.s32.totalorder %s21, 0
      %s244 = scalar_select %p243, %s21, 0
      %s245 = smul.addr %s244, 2
      %s246 = smul.addr %s242, 2
      %s247 = sadd.s32 %s245, %s246
      %s248 = smul.addr %s247, 4
      %s249 = scalar_lea.vmem %s0, %s248
      %p250 = scmp.lt.s32.totalorder %s20, 3
      %s251 = scalar_select %p250, %s20, 3
      %s252 = smul.addr %s251, 32
      %s253 = smul.addr %s252, 4
      %s254 = scalar_lea.vmem %s1, %s253
      %p255 = scmp.lt.s32.totalorder %s20, 3
      %s256 = scalar_select %p255, %s20, 3
      %p257 = scmp.lt.s32.totalorder %s21, 0
      %s258 = scalar_select %p257, %s21, 0
      %s259 = sadd.s32 %s258, %s256
      %s260 = smul.addr %s259, 4
      %s261 = scalar_lea.vmem %s3, %s260
      %p262 = scmp.lt.s32.totalorder %s20, 3
      %s263 = scalar_select %p262, %s20, 3
      %p264 = scmp.lt.s32.totalorder %s21, 0
      %s265 = scalar_select %p264, %s21, 0
      %s266 = sadd.s32 %s265, %s263
      %s267 = smul.addr %s266, 2
      %s268 = scalar_lea.vmem %s4, %s267
      %v269 = vld [vmem:[%s249] sm:$0xff]
      %v270 = vld [vmem:[%s254] sm:$0xf]
      %v271 = vld [vmem:[%s254 + $0x4] sm:$0xf]
      %v272 = vld [vmem:[%s254 + $0x8] sm:$0xf]
      %v273 = vld [vmem:[%s254 + $0xc] sm:$0xf]
      %v274 = vld [vmem:[%s254 + $0x10] sm:$0xf]
      %v275 = vld [vmem:[%s254 + $0x14] sm:$0xf]
      %v276 = vld [vmem:[%s254 + $0x18] sm:$0xf]
      %v277 = vld [vmem:[%s254 + $0x1c] sm:$0xf]
      %v278 = vld [vmem:[%s254 + $0x20] sm:$0xf]
      %v279 = vld [vmem:[%s254 + $0x24] sm:$0xf]
      %v280 = vld [vmem:[%s254 + $0x28] sm:$0xf]
      %v281 = vld [vmem:[%s254 + $0x2c] sm:$0xf]
      %v282 = vld [vmem:[%s254 + $0x30] sm:$0xf]
      %v283 = vld [vmem:[%s254 + $0x34] sm:$0xf]
      %v284 = vld [vmem:[%s254 + $0x38] sm:$0xf]
      %v285 = vld [vmem:[%s254 + $0x3c] sm:$0xf]
      %v286 = vld [vmem:[%s254 + $0x40] sm:$0xf]
      %v287 = vld [vmem:[%s254 + $0x44] sm:$0xf]
      %v288 = vld [vmem:[%s254 + $0x48] sm:$0xf]
      %v289 = vld [vmem:[%s254 + $0x4c] sm:$0xf]
      %v290 = vld [vmem:[%s254 + $0x50] sm:$0xf]
      %v291 = vld [vmem:[%s254 + $0x54] sm:$0xf]
      %v292 = vld [vmem:[%s254 + $0x58] sm:$0xf]
      %v293 = vld [vmem:[%s254 + $0x5c] sm:$0xf]
      %v294 = vld [vmem:[%s254 + $0x60] sm:$0xf]
      %v295 = vld [vmem:[%s254 + $0x64] sm:$0xf]
      %v296 = vld [vmem:[%s254 + $0x68] sm:$0xf]
      %v297 = vld [vmem:[%s254 + $0x6c] sm:$0xf]
      %v298 = vld [vmem:[%s254 + $0x70] sm:$0xf]
      %v299 = vld [vmem:[%s254 + $0x74] sm:$0xf]
      %v300 = vld [vmem:[%s254 + $0x78] sm:$0xf]
      %v301 = vld [vmem:[%s254 + $0x7c] sm:$0xf]
      %v302 = vld [vmem:[%s2] sm:$0x1]
      %v304 = vperm.slane %v302, 0
      %v307 = vunpack.c.l.b16 %v269
      %v308 = vunpack.c.h.b16 %v269
      %v309 = vpack.c.b16 %v307, %v307
      %v310 = vpack.c.b16 %v308, %v308
      %v345 = vunpack.c.l.b16 %v270
      %v346 = vunpack.c.l.b16 %v271
      %v347 = vunpack.c.l.b16 %v272
      %v348 = vunpack.c.l.b16 %v273
      %v349 = vunpack.c.l.b16 %v274
      %v350 = vunpack.c.l.b16 %v275
      %v351 = vunpack.c.l.b16 %v276
      %v352 = vunpack.c.l.b16 %v277
      %v353 = vunpack.c.l.b16 %v278
      %v354 = vunpack.c.l.b16 %v279
      %v355 = vunpack.c.l.b16 %v280
      %v356 = vunpack.c.l.b16 %v281
      %v357 = vunpack.c.l.b16 %v282
      %v358 = vunpack.c.l.b16 %v283
      %v359 = vunpack.c.l.b16 %v284
      %v360 = vunpack.c.l.b16 %v285
      %v361 = vunpack.c.l.b16 %v286
      %v362 = vunpack.c.l.b16 %v287
      %v363 = vunpack.c.l.b16 %v288
      %v364 = vunpack.c.l.b16 %v289
      %v365 = vunpack.c.l.b16 %v290
      %v366 = vunpack.c.l.b16 %v291
      %v367 = vunpack.c.l.b16 %v292
      %v368 = vunpack.c.l.b16 %v293
      %v369 = vunpack.c.l.b16 %v294
      %v370 = vunpack.c.l.b16 %v295
      %v371 = vunpack.c.l.b16 %v296
      %v372 = vunpack.c.l.b16 %v297
      %v373 = vunpack.c.l.b16 %v298
      %v374 = vunpack.c.l.b16 %v299
      %v375 = vunpack.c.l.b16 %v300
      %v376 = vunpack.c.l.b16 %v301
      %v377 = vpack.c.b16 %v346, %v345
      %v378 = vpack.c.b16 %v348, %v347
      %v379 = vpack.c.b16 %v350, %v349
      %v380 = vpack.c.b16 %v352, %v351
      %v381 = vpack.c.b16 %v354, %v353
      %v382 = vpack.c.b16 %v356, %v355
      %v383 = vpack.c.b16 %v358, %v357
      %v384 = vpack.c.b16 %v360, %v359
      %v385 = vpack.c.b16 %v362, %v361
      %v386 = vpack.c.b16 %v364, %v363
      %v387 = vpack.c.b16 %v366, %v365
      %v388 = vpack.c.b16 %v368, %v367
      %v389 = vpack.c.b16 %v370, %v369
      %v390 = vpack.c.b16 %v372, %v371
      %v391 = vpack.c.b16 %v374, %v373
      %v392 = vpack.c.b16 %v376, %v375
      %409 = vmatpush.bf16.msra.mxu0 %v384
      %410 = vmatpush.bf16.msra.mxu0 %v383
      %411 = vmatpush.bf16.msra.mxu0 %v382
      %412 = vmatpush.bf16.msra.mxu0 %v381
      %413 = vmatpush.bf16.msra.mxu0 %v380
      %414 = vmatpush.bf16.msra.mxu0 %v379
      %415 = vmatpush.bf16.msra.mxu0 %v378
      %416 = vmatpush.bf16.msra.mxu0 %v377
      %417 = vmatmul.bf16.gmra.mxu0 %v309
      %v418 = vpop.f32.mrf.mxu0
      %v419 = vadd.f32 %v304, %v418
      %v420 = vpop.f32.mrf.mxu0
      %421 = vdwg.mxu0
      %422 = vmatpush.bf16.msra.mxu0 %v392
      %423 = vmatpush.bf16.msra.mxu0 %v391
      %424 = vmatpush.bf16.msra.mxu0 %v390
      %425 = vmatpush.bf16.msra.mxu0 %v389
      %426 = vmatpush.bf16.msra.mxu0 %v388
      %427 = vmatpush.bf16.msra.mxu0 %v387
      %428 = vmatpush.bf16.msra.mxu0 %v386
      %429 = vmatpush.bf16.msra.mxu0 %v385
      %430 = vmatmul.bf16.gmra.mxu0 %v310
      %v431 = vpop.f32.mrf.mxu0
      %v432 = vadd.f32 %v419, %v431
      %v433 = vpop.f32.mrf.mxu0
      %434 = vdwg.mxu0
      %v435 = vpack.c.bf16 %v432, %v432
      %vm436 = vcmask 257024
      %437 = vst.msk [vmem:[%s261] sm:$0xf] %vm436, %v435
      %vm438 = vcmask 261120
      %v439 = vsel %vm438, %v432, 0.0
      %v440 = vrot.slane %v439, 4
      %v441 = vadd.f32 %v439, %v440
      %v442 = vrot.slane %v441, 2
      %v443 = vadd.f32 %v441, %v442
      %v444 = vrot.slane %v443, 1
      %v445 = vadd.f32 %v443, %v444
      %vm446 = vcmask 253952
      %447 = vst.msk [vmem:[%s268] sm:$0x1] %vm446, %v445
      %v448 = vmul.f32 %v432, %v432
      %v449 = vsel %vm438, %v448, 0.0
      %v450 = vrot.slane %v449, 4
      %v451 = vadd.f32 %v449, %v450
      %v452 = vrot.slane %v451, 2
      %v453 = vadd.f32 %v451, %v452
      %v454 = vrot.slane %v453, 1
      %v455 = vadd.f32 %v453, %v454
      %456 = vst.msk [vmem:[%s268 + $0x1] sm:$0x1] %vm446, %v455
      %p457 = scmp.lt.s32.totalorder %s20, 3
      %s458 = scalar_select %p457, %s20, 3
      %p459 = scmp.lt.s32.totalorder %s21, 0
      %s460 = scalar_select %p459, %s21, 0
      %s461 = sadd.s32 %s460, %s458
      %s462 = smul.addr %s461, 4
      %s463 = scalar_lea.vmem %s3, %s462
      %p464 = scmp.lt.s32.totalorder %s20, 3
      %s465 = scalar_select %p464, %s20, 3
      %p466 = scmp.lt.s32.totalorder %s21, 0
      %s467 = scalar_select %p466, %s21, 0
      %s468 = sadd.s32 %s467, %s465
      %s469 = smul.addr %s468, 2
      %s470 = scalar_lea.vmem %s4, %s469
      // Predicated region
      $region33: #{_forward_impl.9} parent=31 // pred_check
        %p471 = pneg %p123
      $region34: #{_forward_impl.9} parent=31 // pred_check_branch
        %473 = sbr.rel (%p471) target = $region36
      $region35: #{_forward_impl.9} parent=31 // pred_region
        _
      $region36: #{_forward_impl.9} parent=31 // pred_fallthru
        _
      // Predicated region
      $region37: #{_forward_impl.9} parent=31 // pred_check
        %p474 = pneg %p151
      $region38: #{_forward_impl.9} parent=31 // pred_check_branch
        %476 = sbr.rel (%p474) target = $region40
      $region39: #{_forward_impl.9} parent=31 // pred_region
        _
      $region40: #{_forward_impl.9} parent=31 // pred_fallthru
        _
    $region32: #{_forward_impl.9} parent=5 // pred_fallthru
      _
    %p477 = scmp.le.s32.totalorder 2, %s11
    // Predicated region
    $region41: #{_forward_impl.9} parent=5 // pred_check
      %p478 = pneg %p477
    $region42: #{_forward_impl.9} parent=5 // pred_check_branch
      %480 = sbr.rel (%p478) target = $region44
    $region43: #{_forward_impl.9} parent=5 // pred_region
      %s481 = ssub.s32 %s11, 2
      // Predicated region
      $region45: #{_forward_impl.9} parent=43 // pred_check
        %p482 = pneg %p129
      $region46: #{_forward_impl.9} parent=43 // pred_check_branch
        %484 = sbr.rel (%p482) target = $region48
      $region47: #{_forward_impl.9} parent=43 // pred_region
        %p485 = scmp.lt.s32.totalorder %s22, 3
        %s486 = scalar_select %p485, %s22, 3
        %p487 = scmp.lt.s32.totalorder %s23, 0
        %s488 = scalar_select %p487, %s23, 0
        %s489 = sadd.s32 %s488, %s486
        %s490 = smul.addr %s489, 4
        %s491 = scalar_lea.vmem %s3, %s490
      $region48: #{_forward_impl.9} parent=43 // pred_fallthru
        _
      // Predicated region
      $region49: #{_forward_impl.9} parent=43 // pred_check
        %p492 = pneg %p157
      $region50: #{_forward_impl.9} parent=43 // pred_check_branch
        %494 = sbr.rel (%p492) target = $region52
      $region51: #{_forward_impl.9} parent=43 // pred_region
        %p495 = scmp.lt.s32.totalorder %s22, 3
        %s496 = scalar_select %p495, %s22, 3
        %p497 = scmp.lt.s32.totalorder %s23, 0
        %s498 = scalar_select %p497, %s23, 0
        %s499 = sadd.s32 %s498, %s496
        %s500 = smul.addr %s499, 2
        %s501 = scalar_lea.vmem %s4, %s500
      $region52: #{_forward_impl.9} parent=43 // pred_fallthru
        _
    $region44: #{_forward_impl.9} parent=5 // pred_fallthru
      _
  $region6: #{_forward_impl.9} parent=0 // loop_footer
    %s15 = sadd.s32 1, %s11
  $region7: #{_forward_impl.9} parent=0 // loop_footer_branch
    %10 = sbr.rel target = $region3
  $region8: #{_forward_impl.9} parent=0 // loop_exit
    _

// kernel: _forward_impl.10
$region0: #{_forward_impl.10}
  #allocation0 [shape = 'u32[]', space=smem, size = 0x4, offset = 0x4, fixed_abs, tag = 'smem constant byte address 0x4 - core index']
  #allocation1 [shape = 'u32[72,128]{1,0:T(1,128)}', space=vmem, size = 0x9000, scoped, tag = 'internal scratch']
  %s0 = inlined_call_operand.vmem [shape: bf16[8,128], index: 0, kind: input, shape index: {}]
  %s1 = inlined_call_operand.vmem [shape: f32[1,128], index: 1, kind: input, shape index: {}]
  %s2 = inlined_call_operand.vmem [shape: f32[1,128], index: 2, kind: input, shape index: {}]
  %s3 = inlined_call_operand.vmem [shape: bf16[8,128], index: 3, kind: output, shape index: {}]
  %s4 = sld [smem:[#allocation0]]
  $region22: #{_forward_impl.10} parent=0
    _
  %s6 = ssub.s32 1, %s4
  %s7 = scalar_select 0, %s6, %s4
  // Predicated region
  $region2: #{_forward_impl.10} parent=0 // pred_check
    _
  $region3: #{_forward_impl.10} parent=0 // pred_check_branch
    %9 = sbr.rel (0) target = $region5
  $region4: #{_forward_impl.10} parent=0 // pred_region
    _
  $region5: #{_forward_impl.10} parent=0 // pred_fallthru
    _
  // Predicated region
  $region6: #{_forward_impl.10} parent=0 // pred_check
    _
  $region7: #{_forward_impl.10} parent=0 // pred_check_branch
    %11 = sbr.rel (0) target = $region9
  $region8: #{_forward_impl.10} parent=0 // pred_region
    _
  $region9: #{_forward_impl.10} parent=0 // pred_fallthru
    _
  // Predicated region
  $region10: #{_forward_impl.10} parent=0 // pred_check
    _
  $region11: #{_forward_impl.10} parent=0 // pred_check_branch
    %13 = sbr.rel (0) target = $region13
  $region12: #{_forward_impl.10} parent=0 // pred_region
    _
  $region13: #{_forward_impl.10} parent=0 // pred_fallthru
    _
  %v14 = vld [vmem:[%s0] sm:$0xf]
  %v15 = vunpack.c.l.bf16 %v14
  %v16 = vld [vmem:[%s1] sm:$0x1]
  %v18 = vperm.slane %v16, 0
  %v20 = vmul.f32 %v15, %v18
  %v21 = vld [vmem:[%s2] sm:$0x1]
  %v23 = vperm.slane %v21, 0
  %v25 = vadd.f32 %v20, %v23
  %v26 = vmax.f32 %v25, 0.0
  %v27 = vpack.c.bf16 %v26, %v26
  %28 = vst [vmem:[%s3] sm:$0xf] %v27
  // Predicated region
  $region14: #{_forward_impl.10} parent=0 // pred_check
    _
  $region15: #{_forward_impl.10} parent=0 // pred_check_branch
    %30 = sbr.rel (0) target = $region17
  $region16: #{_forward_impl.10} parent=0 // pred_region
    _
  $region17: #{_forward_impl.10} parent=0 // pred_fallthru
    _
  // Predicated region
  $region18: #{_forward_impl.10} parent=0 // pred_check
    _
  $region19: #{_forward_impl.10} parent=0 // pred_check_branch
    %32 = sbr.rel (0) target = $region21
  $region20: #{_forward_impl.10} parent=0 // pred_region
    _
  $region21: #{_forward_impl.10} parent=0 // pred_fallthru
    _

// kernel: _forward_impl.11
$region0: #{_forward_impl.11}
  #allocation0 [shape = 'u32[]', space=smem, size = 0x4, offset = 0x4, fixed_abs, tag = 'smem constant byte address 0x4 - core index']
  #allocation1 [shape = 'u32[72,128]{1,0:T(1,128)}', space=vmem, size = 0x9000, scoped, tag = 'internal scratch']
  %s0 = inlined_call_operand.vmem [shape: bf16[4,32,128], index: 0, kind: input, shape index: {}]
  %s1 = inlined_call_operand.vmem [shape: bf16[4,128,16], index: 1, kind: input, shape index: {}]
  %s2 = inlined_call_operand.vmem [shape: f32[1,16], index: 2, kind: input, shape index: {}]
  %s3 = inlined_call_operand.vmem [shape: bf16[4,32,16], index: 3, kind: output, shape index: {0}]
  %s4 = inlined_call_operand.vmem [shape: f32[4,1,2,16], index: 4, kind: output, shape index: {1}]
  %5 = xla_tuple %s3, %s4
  %s6 = sld [smem:[#allocation0]]
  $region53: #{_forward_impl.11} parent=0
    _
  %s8 = ssub.s32 1, %s6
  %s9 = scalar_select 0, %s8, %s6
  loop: start=0, step=1, limit=6
  $region2: #{_forward_impl.11} parent=0 // loop_pre_header
    _
  $region3: #{_forward_impl.11} parent=0 // loop_header
    %s11 = sphi 0, %s15
    %p12 = scmp.ge.s32.totalorder %s11, 6
    %s18 = sphi 0, %s30
    %s19 = sphi 0, %s26
    %s20 = sphi 0, %s18
    %s21 = sphi 0, %s19
    %s22 = sphi 0, %s20
    %s23 = sphi 0, %s21
    %s35 = sphi 0, %s37
    %s38 = sphi 0, %s35
    %s39 = sphi 0, %s38
    %s55 = sphi 0, %s39
    %s61 = sphi 0, %s63
    %s64 = sphi 0, %s61
    %s65 = sphi 0, %s64
    %s81 = sphi 0, %s65
    %s85 = sphi 0, %s85
    %s87 = sphi 0, %s85
    %s88 = sphi 0, %s87
    %s102 = sphi 0, %s88
    %s110 = sphi 0, %s112
    %s113 = sphi 0, %s110
    %s114 = sphi 0, %s113
    %s130 = sphi 0, %s114
    %s138 = sphi 0, %s140
    %s141 = sphi 0, %s138
    %s142 = sphi 0, %s141
    %s158 = sphi 0, %s142
  $region4: #{_forward_impl.11} parent=0 // loop_header_branch
    %14 = sbr.rel (%p12) target = $region8
  $region5: #{_forward_impl.11} parent=0 // loop_body
    %s16 = ssub.s32 %s11, 1
    %s17 = ssub.s32 %s11, 2
    %s24 = sadd.s32 1, %s19
    %p25 = scmp.ge.s32.totalorder %s24, 1
    %s26 = scalar_select %p25, 0, %s24
    %s27 = sadd.s32 1, %s18
    %s28 = scalar_select %p25, %s27, %s18
    %p29 = scmp.ge.s32.totalorder %s28, 4
    %s30 = scalar_select %p29, 0, %s28
    %s31 = ssub.s32 %s18, %s30
    %s32 = ssub.s32 %s19, %s26
    %s33 = sor.u32 %s31, %s32
    %p34 = scmp.eq.s32.totalorder %s33, 0
    %s36 = sadd.s32 %s35, 1
    %s37 = scalar_select %p34, %s35, %s36
    %p40 = pneg %p34
    %p41 = scmp.eq.s32.totalorder %s11, 3
    %p42 = por %p40, %p41
    %p43 = scmp.ne.s32.totalorder %s35, %s38
    %p44 = scmp.eq.s32.totalorder %s11, 0
    %p45 = por %p43, %p44
    %p46 = scmp.ne.s32.totalorder %s35, %s38
    %p47 = scmp.eq.s32.totalorder %s16, 3
    %p48 = por %p46, %p47
    %p49 = scmp.ne.s32.totalorder %s38, %s39
    %p50 = scmp.eq.s32.totalorder %s16, 0
    %p51 = por %p49, %p50
    %p52 = scmp.ne.s32.totalorder %s38, %s39
    %p53 = scmp.eq.s32.totalorder %s17, 3
    %p54 = por %p52, %p53
    %p56 = scmp.ne.s32.totalorder %s39, %s55
    %p57 = scmp.eq.s32.totalorder %s17, 0
    %p58 = por %p56, %p57
    %s59 = ssub.s32 %s18, %s30
    %p60 = scmp.eq.s32.totalorder %s59, 0
    %s62 = sadd.s32 %s61, 1
    %s63 = scalar_select %p60, %s61, %s62
    %p66 = pneg %p60
    %p67 = scmp.eq.s32.totalorder %s11, 3
    %p68 = por %p66, %p67
    %p69 = scmp.ne.s32.totalorder %s61, %s64
    %p70 = scmp.eq.s32.totalorder %s11, 0
    %p71 = por %p69, %p70
    %p72 = scmp.ne.s32.totalorder %s61, %s64
    %p73 = scmp.eq.s32.totalorder %s16, 3
    %p74 = por %p72, %p73
    %p75 = scmp.ne.s32.totalorder %s64, %s65
    %p76 = scmp.eq.s32.totalorder %s16, 0
    %p77 = por %p75, %p76
    %p78 = scmp.ne.s32.totalorder %s64, %s65
    %p79 = scmp.eq.s32.totalorder %s17, 3
    %p80 = por %p78, %p79
    %p82 = scmp.ne.s32.totalorder %s65, %s81
    %p83 = scmp.eq.s32.totalorder %s17, 0
    %p84 = por %p82, %p83
    %s86 = sadd.s32 %s85, 1
    %p89 = scmp.eq.s32.totalorder %s11, 3
    %p90 = scmp.ne.s32.totalorder %s85, %s87
    %p91 = scmp.eq.s32.totalorder %s11, 0
    %p92 = por %p90, %p91
    %p93 = scmp.ne.s32.totalorder %s85, %s87
    %p94 = scmp.eq.s32.totalorder %s16, 3
    %p95 = por %p93, %p94
    %p96 = scmp.ne.s32.totalorder %s87, %s88
    %p97 = scmp.eq.s32.totalorder %s16, 0
    %p98 = por %p96, %p97
    %p99 = scmp.ne.s32.totalorder %s87, %s88
    %p100 = scmp.eq.s32.totalorder %s17, 3
    %p101 = por %p99, %p100
    %p103 = scmp.ne.s32.totalorder %s88, %s102
    %p104 = scmp.eq.s32.totalorder %s17, 0
    %p105 = por %p103, %p104
    %s106 = ssub.s32 %s18, %s30
    %s107 = ssub.s32 %s19, %s26
    %s108 = sor.u32 %s106, %s107
    %p109 = scmp.eq.s32.totalorder %s108, 0
    %s111 = sadd.s32 %s110, 1
    %s112 = scalar_select %p109, %s110, %s111
    %p115 = pneg %p109
    %p116 = scmp.eq.s32.totalorder %s11, 3
    %p117 = por %p115, %p116
    %p118 = scmp.ne.s32.totalorder %s110, %s113
    %p119 = scmp.eq.s32.totalorder %s11, 0
    %p120 = por %p118, %p119
    %p121 = scmp.ne.s32.totalorder %s110, %s113
    %p122 = scmp.eq.s32.totalorder %s16, 3
    %p123 = por %p121, %p122
    %p124 = scmp.ne.s32.totalorder %s113, %s114
    %p125 = scmp.eq.s32.totalorder %s16, 0
    %p126 = por %p124, %p125
    %p127 = scmp.ne.s32.totalorder %s113, %s114
    %p128 = scmp.eq.s32.totalorder %s17, 3
    %p129 = por %p127, %p128
    %p131 = scmp.ne.s32.totalorder %s114, %s130
    %p132 = scmp.eq.s32.totalorder %s17, 0
    %p133 = por %p131, %p132
    %s134 = ssub.s32 %s18, %s30
    %s135 = ssub.s32 %s19, %s26
    %s136 = sor.u32 %s134, %s135
    %p137 = scmp.eq.s32.totalorder %s136, 0
    %s139 = sadd.s32 %s138, 1
    %s140 = scalar_select %p137, %s138, %s139
    %p143 = pneg %p137
    %p144 = scmp.eq.s32.totalorder %s11, 3
    %p145 = por %p143, %p144
    %p146 = scmp.ne.s32.totalorder %s138, %s141
    %p147 = scmp.eq.s32.totalorder %s11, 0
    %p148 = por %p146, %p147
    %p149 = scmp.ne.s32.totalorder %s138, %s141
    %p150 = scmp.eq.s32.totalorder %s16, 3
    %p151 = por %p149, %p150
    %p152 = scmp.ne.s32.totalorder %s141, %s142
    %p153 = scmp.eq.s32.totalorder %s16, 0
    %p154 = por %p152, %p153
    %p155 = scmp.ne.s32.totalorder %s141, %s142
    %p156 = scmp.eq.s32.totalorder %s17, 3
    %p157 = por %p155, %p156
    %p159 = scmp.ne.s32.totalorder %s142, %s158
    %p160 = scmp.eq.s32.totalorder %s17, 0
    %p161 = por %p159, %p160
    %p162 = scmp.le.s32.totalorder 1, %s11
    %p163 = scmp.lt.s32.totalorder %s11, 5
    %p164 = pnand %p162, %p163
    %p165 = pneg %p164
    // Predicated region
    $region9: #{_forward_impl.11} parent=5 // pred_check
      _
    $region10: #{_forward_impl.11} parent=5 // pred_check_branch
      %167 = sbr.rel (%p164) target = $region12
    $region11: #{_forward_impl.11} parent=5 // pred_region
      %s168 = ssub.s32 %s11, 1
      // Predicated region
      $region13: #{_forward_impl.11} parent=11 // pred_check
        %p169 = pneg %p98
      $region14: #{_forward_impl.11} parent=11 // pred_check_branch
        %171 = sbr.rel (%p169) target = $region16
      $region15: #{_forward_impl.11} parent=11 // pred_region
        _
      $region16: #{_forward_impl.11} parent=11 // pred_fallthru
        _
    $region12: #{_forward_impl.11} parent=5 // pred_fallthru
      _
    %p172 = scmp.lt.s32.totalorder %s11, 4
    // Predicated region
    $region17: #{_forward_impl.11} parent=5 // pred_check
      %p173 = pneg %p172
    $region18: #{_forward_impl.11} parent=5 // pred_check_branch
      %175 = sbr.rel (%p173) target = $region20
    $region19: #{_forward_impl.11} parent=5 // pred_region
      // Predicated region
      $region21: #{_forward_impl.11} parent=19 // pred_check
        %p176 = pneg %p45
      $region22: #{_forward_impl.11} parent=19 // pred_check_branch
        %178 = sbr.rel (%p176) target = $region24
      $region23: #{_forward_impl.11} parent=19 // pred_region
        %s179 = smul.u32 4, %s19
        %p180 = scmp.lt.s32.totalorder %s18, 3
        %s181 = scalar_select %p180, %s18, 3
        %p182 = scmp.lt.s32.totalorder %s179, 3
        %s183 = scalar_select %p182, %s179, 3
        %s184 = smul.addr %s181, 4
        %s185 = sadd.s32 %s183, %s184
        %s186 = smul.addr %s185, 4
        %s187 = scalar_lea.vmem %s0, %s186
        %s188 = smul.u32 4, %s19
      $region24: #{_forward_impl.11} parent=19 // pred_fallthru
        _
      // Predicated region
      $region25: #{_forward_impl.11} parent=19 // pred_check
        %p189 = pneg %p71
      $region26: #{_forward_impl.11} parent=19 // pred_check_branch
        %191 = sbr.rel (%p189) target = $region28
      $region27: #{_forward_impl.11} parent=19 // pred_region
        %p192 = scmp.lt.s32.totalorder %s18, 3
        %s193 = scalar_select %p192, %s18, 3
        %s194 = smul.addr %s193, 16
        %s195 = smul.addr %s194, 4
        %s196 = scalar_lea.vmem %s1, %s195
      $region28: #{_forward_impl.11} parent=19 // pred_fallthru
        _
    $region20: #{_forward_impl.11} parent=5 // pred_fallthru
      _
    %p197 = scmp.le.s32.totalorder 1, %s11
    %p198 = scmp.lt.s32.totalorder %s11, 5
    %p199 = pnand %p197, %p198
    %p200 = pneg %p199
    // Predicated region
    $region29: #{_forward_impl.11} parent=5 // pred_check
      _
    $region30: #{_forward_impl.11} parent=5 // pred_check_branch
      %202 = sbr.rel (%p199) target = $region32
    $region31: #{_forward_impl.11} parent=5 // pred_region
      %s203 = ssub.s32 %s11, 1
      %s204 = smul.u32 4, %s21
      %p205 = scmp.lt.s32.totalorder %s20, 3
      %s206 = scalar_select %p205, %s20, 3
      %p207 = scmp.lt.s32.totalorder %s204, 3
      %s208 = scalar_select %p207, %s204, 3
      %s209 = smul.addr %s206, 4
      %s210 = sadd.s32 %s208, %s209
      %s211 = smul.addr %s210, 4
      %s212 = scalar_lea.vmem %s0, %s211
      %p213 = pneg %p51
      %p214 = pneg %p48
      %p215 = scmp.lt.s32.totalorder %s20, 3
      %s216 = scalar_select %p215, %s20, 3
      %s217 = smul.addr %s216, 16
      %s218 = smul.addr %s217, 4
      %s219 = scalar_lea.vmem %s1, %s218
      %p220 = pneg %p77
      %p221 = pneg %p74
      %p222 = pneg %p98
      %p223 = pneg %p95
      %p224 = pneg %p126
      %p225 = pneg %p123
      %s226 = smul.u32 4, %s21
      %p227 = scmp.lt.s32.totalorder %s20, 3
      %s228 = scalar_select %p227, %s20, 3
      %p229 = scmp.lt.s32.totalorder %s226, 3
      %s230 = scalar_select %p229, %s226, 3
      %s231 = smul.addr %s228, 4
      %s232 = sadd.s32 %s230, %s231
      %s233 = smul.addr %s232, 4
      %s234 = scalar_lea.vmem %s3, %s233
      %p235 = pneg %p154
      %p236 = pneg %p151
      %p237 = scmp.lt.s32.totalorder %s20, 3
      %s238 = scalar_select %p237, %s20, 3
      %p239 = scmp.lt.s32.totalorder %s21, 0
      %s240 = scalar_select %p239, %s21, 0
      %s241 = sadd.s32 %s240, %s238
      %s242 = smul.addr %s241, 2
      %s243 = scalar_lea.vmem %s4, %s242
      %s244 = smul.u32 4, %s21
      %p245 = scmp.lt.s32.totalorder %s20, 3
      %s246 = scalar_select %p245, %s20, 3
      %p247 = scmp.lt.s32.totalorder %s244, 3
      %s248 = scalar_select %p247, %s244, 3
      %s249 = smul.addr %s246, 4
      %s250 = sadd.s32 %s248, %s249
      %s251 = smul.addr %s250, 4
      %s252 = scalar_lea.vmem %s0, %s251
      %s253 = smul.u32 4, %s21
      %p254 = scmp.lt.s32.totalorder %s20, 3
      %s255 = scalar_select %p254, %s20, 3
      %s256 = smul.addr %s255, 16
      %s257 = smul.addr %s256, 4
      %s258 = scalar_lea.vmem %s1, %s257
      %s259 = smul.u32 4, %s21
      %p260 = scmp.lt.s32.totalorder %s20, 3
      %s261 = scalar_select %p260, %s20, 3
      %p262 = scmp.lt.s32.totalorder %s259, 3
      %s263 = scalar_select %p262, %s259, 3
      %s264 = smul.addr %s261, 4
      %s265 = sadd.s32 %s263, %s264
      %s266 = smul.addr %s265, 4
      %s267 = scalar_lea.vmem %s3, %s266
      %s268 = smul.u32 4, %s21
      %p269 = scmp.lt.s32.totalorder %s20, 3
      %s270 = scalar_select %p269, %s20, 3
      %p271 = scmp.lt.s32.totalorder %s21, 0
      %s272 = scalar_select %p271, %s21, 0
      %s273 = sadd.s32 %s272, %s270
      %s274 = smul.addr %s273, 2
      %s275 = scalar_lea.vmem %s4, %s274
      %v276 = vld [vmem:[%s252] sm:$0xf]
      %v277 = vld [vmem:[%s252 + $0x4] sm:$0xf]
      %v278 = vld [vmem:[%s252 + $0x8] sm:$0xf]
      %v279 = vld [vmem:[%s252 + $0xc] sm:$0xf]
      %v280 = vld [vmem:[%s258] sm:$0xf]
      %v281 = vld [vmem:[%s258 + $0x4] sm:$0xf]
      %v282 = vld [vmem:[%s258 + $0x8] sm:$0xf]
      %v283 = vld [vmem:[%s258 + $0xc] sm:$0xf]
      %v284 = vld [vmem:[%s258 + $0x10] sm:$0xf]
      %v285 = vld [vmem:[%s258 + $0x14] sm:$0xf]
      %v286 = vld [vmem:[%s258 + $0x18] sm:$0xf]
      %v287 = vld [vmem:[%s258 + $0x1c] sm:$0xf]
      %v288 = vld [vmem:[%s258 + $0x20] sm:$0xf]
      %v289 = vld [vmem:[%s258 + $0x24] sm:$0xf]
      %v290 = vld [vmem:[%s258 + $0x28] sm:$0xf]
      %v291 = vld [vmem:[%s258 + $0x2c] sm:$0xf]
      %v292 = vld [vmem:[%s258 + $0x30] sm:$0xf]
      %v293 = vld [vmem:[%s258 + $0x34] sm:$0xf]
      %v294 = vld [vmem:[%s258 + $0x38] sm:$0xf]
      %v295 = vld [vmem:[%s258 + $0x3c] sm:$0xf]
      %v296 = vld [vmem:[%s2] sm:$0x1]
      %v298 = vperm.slane %v296, 0
      %v304 = vunpack.c.l.b16 %v276
      %v305 = vunpack.c.l.b16 %v277
      %v306 = vunpack.c.l.b16 %v278
      %v307 = vunpack.c.l.b16 %v279
      %v308 = vpack.c.b16 %v305, %v304
      %v309 = vpack.c.b16 %v307, %v306
      %v328 = vunpack.c.l.b16 %v280
      %v329 = vunpack.c.l.b16 %v281
      %v330 = vunpack.c.l.b16 %v282
      %v331 = vunpack.c.l.b16 %v283
      %v332 = vunpack.c.l.b16 %v284
      %v333 = vunpack.c.l.b16 %v285
      %v334 = vunpack.c.l.b16 %v286
      %v335 = vunpack.c.l.b16 %v287
      %v336 = vunpack.c.l.b16 %v288
      %v337 = vunpack.c.l.b16 %v289
      %v338 = vunpack.c.l.b16 %v290
      %v339 = vunpack.c.l.b16 %v291
      %v340 = vunpack.c.l.b16 %v292
      %v341 = vunpack.c.l.b16 %v293
      %v342 = vunpack.c.l.b16 %v294
      %v343 = vunpack.c.l.b16 %v295
      %v344 = vpack.c.b16 %v329, %v328
      %v345 = vpack.c.b16 %v331, %v330
      %v346 = vpack.c.b16 %v333, %v332
      %v347 = vpack.c.b16 %v335, %v334
      %v348 = vpack.c.b16 %v337, %v336
      %v349 = vpack.c.b16 %v339, %v338
      %v350 = vpack.c.b16 %v341, %v340
      %v351 = vpack.c.b16 %v343, %v342
      %360 = vmatpush.bf16.msra.mxu0 %v351
      %361 = vmatpush.bf16.msra.mxu0 %v350
      %362 = vmatpush.bf16.msra.mxu0 %v349
      %363 = vmatpush.bf16.msra.mxu0 %v348
      %364 = vmatpush.bf16.msra.mxu0 %v347
      %365 = vmatpush.bf16.msra.mxu0 %v346
      %366 = vmatpush.bf16.msra.mxu0 %v345
      %367 = vmatpush.bf16.msra.mxu0 %v344
      %368 = vmatmul.bf16.gmra.mxu0 %v308
      %v369 = vpop.f32.mrf.mxu0
      %v370 = vadd.f32 %v298, %v369
      %v371 = vpop.f32.mrf.mxu0
      %v372 = vadd.f32 %v298, %v371
      %373 = vmatmul.bf16.gmra.mxu0 %v309
      %v374 = vpop.f32.mrf.mxu0
      %v375 = vadd.f32 %v298, %v374
      %v376 = vpop.f32.mrf.mxu0
      %v377 = vadd.f32 %v298, %v376
      %378 = vdwg.mxu0
      %v379 = vpack.c.bf16 %v370, %v370
      %v380 = vpack.c.bf16 %v372, %v372
      %v381 = vpack.c.bf16 %v375, %v375
      %v382 = vpack.c.bf16 %v377, %v377
      %vm383 = vcmask 125952
      %384 = vst.msk [vmem:[%s267] sm:$0xf] %vm383, %v379
      %385 = vst.msk [vmem:[%s267 + $0x4] sm:$0xf] %vm383, %v380
      %386 = vst.msk [vmem:[%s267 + $0x8] sm:$0xf] %vm383, %v381
      %387 = vst.msk [vmem:[%s267 + $0xc] sm:$0xf] %vm383, %v382
      %vm388 = vcmask 130048
      %v389 = vsel %vm388, %v370, 0.0
      %v390 = vsel %vm388, %v372, 0.0
      %v391 = vadd.f32 %v389, %v390
      %v392 = vsel %vm388, %v375, 0.0
      %v393 = vadd.f32 %v391, %v392
      %v394 = vsel %vm388, %v377, 0.0
      %v395 = vadd.f32 %v393, %v394
      %v396 = vrot.slane %v395, 4
      %v397 = vadd.f32 %v395, %v396
      %v398 = vrot.slane %v397, 2
      %v399 = vadd.f32 %v397, %v398
      %v400 = vrot.slane %v399, 1
      %v401 = vadd.f32 %v399, %v400
      %vm402 = vcmask 122880
      %403 = vst.msk [vmem:[%s275] sm:$0x1] %vm402, %v401
      %v404 = vmul.f32 %v370, %v370
      %v405 = vmul.f32 %v372, %v372
      %v406 = vmul.f32 %v375, %v375
      %v407 = vmul.f32 %v377, %v377
      %v408 = vsel %vm388, %v404, 0.0
      %v409 = vsel %vm388, %v405, 0.0
      %v410 = vadd.f32 %v408, %v409
      %v411 = vsel %vm388, %v406, 0.0
      %v412 = vadd.f32 %v410, %v411
      %v413 = vsel %vm388, %v407, 0.0
      %v414 = vadd.f32 %v412, %v413
      %v415 = vrot.slane %v414, 4
      %v416 = vadd.f32 %v414, %v415
      %v417 = vrot.slane %v416, 2
      %v418 = vadd.f32 %v416, %v417
      %v419 = vrot.slane %v418, 1
      %v420 = vadd.f32 %v418, %v419
      %421 = vst.msk [vmem:[%s275 + $0x1] sm:$0x1] %vm402, %v420
      %s422 = smul.u32 4, %s21
      %p423 = scmp.lt.s32.totalorder %s20, 3
      %s424 = scalar_select %p423, %s20, 3
      %p425 = scmp.lt.s32.totalorder %s422, 3
      %s426 = scalar_select %p425, %s422, 3
      %s427 = smul.addr %s424, 4
      %s428 = sadd.s32 %s426, %s427
      %s429 = smul.addr %s428, 4
      %s430 = scalar_lea.vmem %s3, %s429
      %p431 = scmp.lt.s32.totalorder %s20, 3
      %s432 = scalar_select %p431, %s20, 3
      %p433 = scmp.lt.s32.totalorder %s21, 0
      %s434 = scalar_select %p433, %s21, 0
      %s435 = sadd.s32 %s434, %s432
      %s436 = smul.addr %s435, 2
      %s437 = scalar_lea.vmem %s4, %s436
      // Predicated region
      $region33: #{_forward_impl.11} parent=31 // pred_check
        %p438 = pneg %p123
      $region34: #{_forward_impl.11} parent=31 // pred_check_branch
        %440 = sbr.rel (%p438) target = $region36
      $region35: #{_forward_impl.11} parent=31 // pred_region
        %s441 = smul.u32 4, %s21
      $region36: #{_forward_impl.11} parent=31 // pred_fallthru
        _
      // Predicated region
      $region37: #{_forward_impl.11} parent=31 // pred_check
        %p442 = pneg %p151
      $region38: #{_forward_impl.11} parent=31 // pred_check_branch
        %444 = sbr.rel (%p442) target = $region40
      $region39: #{_forward_impl.11} parent=31 // pred_region
        _
      $region40: #{_forward_impl.11} parent=31 // pred_fallthru
        _
    $region32: #{_forward_impl.11} parent=5 // pred_fallthru
      _
    %p445 = scmp.le.s32.totalorder 2, %s11
    // Predicated region
    $region41: #{_forward_impl.11} parent=5 // pred_check
      %p446 = pneg %p445
    $region42: #{_forward_impl.11} parent=5 // pred_check_branch
      %448 = sbr.rel (%p446) target = $region44
    $region43: #{_forward_impl.11} parent=5 // pred_region
      %s449 = ssub.s32 %s11, 2
      // Predicated region
      $region45: #{_forward_impl.11} parent=43 // pred_check
        %p450 = pneg %p129
      $region46: #{_forward_impl.11} parent=43 // pred_check_branch
        %452 = sbr.rel (%p450) target = $region48
      $region47: #{_forward_impl.11} parent=43 // pred_region
        %s453 = smul.u32 4, %s23
        %p454 = scmp.lt.s32.totalorder %s22, 3
        %s455 = scalar_select %p454, %s22, 3
        %p456 = scmp.lt.s32.totalorder %s453, 3
        %s457 = scalar_select %p456, %s453, 3
        %s458 = smul.addr %s455, 4
        %s459 = sadd.s32 %s457, %s458
        %s460 = smul.addr %s459, 4
        %s461 = scalar_lea.vmem %s3, %s460
      $region48: #{_forward_impl.11} parent=43 // pred_fallthru
        _
      // Predicated region
      $region49: #{_forward_impl.11} parent=43 // pred_check
        %p462 = pneg %p157
      $region50: #{_forward_impl.11} parent=43 // pred_check_branch
        %464 = sbr.rel (%p462) target = $region52
      $region51: #{_forward_impl.11} parent=43 // pred_region
        %p465 = scmp.lt.s32.totalorder %s22, 3
        %s466 = scalar_select %p465, %s22, 3
        %p467 = scmp.lt.s32.totalorder %s23, 0
        %s468 = scalar_select %p467, %s23, 0
        %s469 = sadd.s32 %s468, %s466
        %s470 = smul.addr %s469, 2
        %s471 = scalar_lea.vmem %s4, %s470
      $region52: #{_forward_impl.11} parent=43 // pred_fallthru
        _
    $region44: #{_forward_impl.11} parent=5 // pred_fallthru
      _
  $region6: #{_forward_impl.11} parent=0 // loop_footer
    %s15 = sadd.s32 1, %s11
  $region7: #{_forward_impl.11} parent=0 // loop_footer_branch
    %10 = sbr.rel target = $region3
  $region8: #{_forward_impl.11} parent=0 // loop_exit
    _

// kernel: _forward_impl.12
$region0: #{_forward_impl.12}
  #allocation0 [shape = 'u32[]', space=smem, size = 0x4, offset = 0x4, fixed_abs, tag = 'smem constant byte address 0x4 - core index']
  #allocation1 [shape = 'u32[72,128]{1,0:T(1,128)}', space=vmem, size = 0x9000, scoped, tag = 'internal scratch']
  %s0 = inlined_call_operand.vmem [shape: bf16[16,128], index: 0, kind: input, shape index: {}]
  %s1 = inlined_call_operand.vmem [shape: f32[1,128], index: 1, kind: input, shape index: {}]
  %s2 = inlined_call_operand.vmem [shape: f32[1,128], index: 2, kind: input, shape index: {}]
  %s3 = inlined_call_operand.vmem [shape: bf16[16,128], index: 3, kind: output, shape index: {}]
  %s4 = sld [smem:[#allocation0]]
  $region22: #{_forward_impl.12} parent=0
    _
  %s6 = ssub.s32 1, %s4
  %s7 = scalar_select 0, %s6, %s4
  // Predicated region
  $region2: #{_forward_impl.12} parent=0 // pred_check
    _
  $region3: #{_forward_impl.12} parent=0 // pred_check_branch
    %9 = sbr.rel (0) target = $region5
  $region4: #{_forward_impl.12} parent=0 // pred_region
    _
  $region5: #{_forward_impl.12} parent=0 // pred_fallthru
    _
  // Predicated region
  $region6: #{_forward_impl.12} parent=0 // pred_check
    _
  $region7: #{_forward_impl.12} parent=0 // pred_check_branch
    %11 = sbr.rel (0) target = $region9
  $region8: #{_forward_impl.12} parent=0 // pred_region
    _
  $region9: #{_forward_impl.12} parent=0 // pred_fallthru
    _
  // Predicated region
  $region10: #{_forward_impl.12} parent=0 // pred_check
    _
  $region11: #{_forward_impl.12} parent=0 // pred_check_branch
    %13 = sbr.rel (0) target = $region13
  $region12: #{_forward_impl.12} parent=0 // pred_region
    _
  $region13: #{_forward_impl.12} parent=0 // pred_fallthru
    _
  %v14 = vld [vmem:[%s0] sm:$0xf]
  %v15 = vld [vmem:[%s0 + $0x4] sm:$0xf]
  %v16 = vunpack.c.l.bf16 %v14
  %v17 = vunpack.c.l.bf16 %v15
  %v18 = vld [vmem:[%s1] sm:$0x1]
  %v20 = vperm.slane %v18, 0
  %v22 = vmul.f32 %v16, %v20
  %v23 = vmul.f32 %v17, %v20
  %v24 = vld [vmem:[%s2] sm:$0x1]
  %v26 = vperm.slane %v24, 0
  %v28 = vadd.f32 %v22, %v26
  %v29 = vadd.f32 %v23, %v26
  %v30 = vmax.f32 %v28, 0.0
  %v31 = vmax.f32 %v29, 0.0
  %v32 = vpack.c.bf16 %v30, %v30
  %v33 = vpack.c.bf16 %v31, %v31
  %34 = vst [vmem:[%s3] sm:$0xf] %v32
  %35 = vst [vmem:[%s3 + $0x4] sm:$0xf] %v33
  // Predicated region
  $region14: #{_forward_impl.12} parent=0 // pred_check
    _
  $region15: #{_forward_impl.12} parent=0 // pred_check_branch
    %37 = sbr.rel (0) target = $region17
  $region16: #{_forward_impl.12} parent=0 // pred_region
    _
  $region17: #{_forward_impl.12} parent=0 // pred_fallthru
    _
  // Predicated region
  $region18: #{_forward_impl.12} parent=0 // pred_check
    _
  $region19: #{_forward_impl.12} parent=0 // pred_check_branch
    %39 = sbr.rel (0) target = $region21
  $region20: #{_forward_impl.12} parent=0 // pred_region
    _
  $region21: #{_forward_impl.12} parent=0 // pred_fallthru
    _

// kernel: _forward_impl.13
$region0: #{_forward_impl.13}
  #allocation0 [shape = 'u32[]', space=smem, size = 0x4, offset = 0x4, fixed_abs, tag = 'smem constant byte address 0x4 - core index']
  #allocation1 [shape = 'u32[72,128]{1,0:T(1,128)}', space=vmem, size = 0x9000, scoped, tag = 'internal scratch']
  %s0 = inlined_call_operand.vmem [shape: bf16[4,128,64], index: 0, kind: input, shape index: {}]
  %s1 = inlined_call_operand.vmem [shape: bf16[4,64,8], index: 1, kind: input, shape index: {}]
  %s2 = inlined_call_operand.vmem [shape: f32[1,8], index: 2, kind: input, shape index: {}]
  %s3 = inlined_call_operand.vmem [shape: bf16[4,128,8], index: 3, kind: output, shape index: {0}]
  %s4 = inlined_call_operand.vmem [shape: f32[4,1,2,8], index: 4, kind: output, shape index: {1}]
  %5 = xla_tuple %s3, %s4
  %s6 = sld [smem:[#allocation0]]
  $region53: #{_forward_impl.13} parent=0
    _
  %s8 = ssub.s32 1, %s6
  %s9 = scalar_select 0, %s8, %s6
  loop: start=0, step=1, limit=6
  $region2: #{_forward_impl.13} parent=0 // loop_pre_header
    _
  $region3: #{_forward_impl.13} parent=0 // loop_header
    %s11 = sphi 0, %s15
    %p12 = scmp.ge.s32.totalorder %s11, 6
    %s18 = sphi 0, %s30
    %s19 = sphi 0, %s26
    %s20 = sphi 0, %s18
    %s21 = sphi 0, %s19
    %s22 = sphi 0, %s20
    %s23 = sphi 0, %s21
    %s35 = sphi 0, %s37
    %s38 = sphi 0, %s35
    %s39 = sphi 0, %s38
    %s55 = sphi 0, %s39
    %s61 = sphi 0, %s63
    %s64 = sphi 0, %s61
    %s65 = sphi 0, %s64
    %s81 = sphi 0, %s65
    %s85 = sphi 0, %s85
    %s87 = sphi 0, %s85
    %s88 = sphi 0, %s87
    %s102 = sphi 0, %s88
    %s110 = sphi 0, %s112
    %s113 = sphi 0, %s110
    %s114 = sphi 0, %s113
    %s130 = sphi 0, %s114
    %s138 = sphi 0, %s140
    %s141 = sphi 0, %s138
    %s142 = sphi 0, %s141
    %s158 = sphi 0, %s142
  $region4: #{_forward_impl.13} parent=0 // loop_header_branch
    %14 = sbr.rel (%p12) target = $region8
  $region5: #{_forward_impl.13} parent=0 // loop_body
    %s16 = ssub.s32 %s11, 1
    %s17 = ssub.s32 %s11, 2
    %s24 = sadd.s32 1, %s19
    %p25 = scmp.ge.s32.totalorder %s24, 1
    %s26 = scalar_select %p25, 0, %s24
    %s27 = sadd.s32 1, %s18
    %s28 = scalar_select %p25, %s27, %s18
    %p29 = scmp.ge.s32.totalorder %s28, 4
    %s30 = scalar_select %p29, 0, %s28
    %s31 = ssub.s32 %s18, %s30
    %s32 = ssub.s32 %s19, %s26
    %s33 = sor.u32 %s31, %s32
    %p34 = scmp.eq.s32.totalorder %s33, 0
    %s36 = sadd.s32 %s35, 1
    %s37 = scalar_select %p34, %s35, %s36
    %p40 = pneg %p34
    %p41 = scmp.eq.s32.totalorder %s11, 3
    %p42 = por %p40, %p41
    %p43 = scmp.ne.s32.totalorder %s35, %s38
    %p44 = scmp.eq.s32.totalorder %s11, 0
    %p45 = por %p43, %p44
    %p46 = scmp.ne.s32.totalorder %s35, %s38
    %p47 = scmp.eq.s32.totalorder %s16, 3
    %p48 = por %p46, %p47
    %p49 = scmp.ne.s32.totalorder %s38, %s39
    %p50 = scmp.eq.s32.totalorder %s16, 0
    %p51 = por %p49, %p50
    %p52 = scmp.ne.s32.totalorder %s38, %s39
    %p53 = scmp.eq.s32.totalorder %s17, 3
    %p54 = por %p52, %p53
    %p56 = scmp.ne.s32.totalorder %s39, %s55
    %p57 = scmp.eq.s32.totalorder %s17, 0
    %p58 = por %p56, %p57
    %s59 = ssub.s32 %s18, %s30
    %p60 = scmp.eq.s32.totalorder %s59, 0
    %s62 = sadd.s32 %s61, 1
    %s63 = scalar_select %p60, %s61, %s62
    %p66 = pneg %p60
    %p67 = scmp.eq.s32.totalorder %s11, 3
    %p68 = por %p66, %p67
    %p69 = scmp.ne.s32.totalorder %s61, %s64
    %p70 = scmp.eq.s32.totalorder %s11, 0
    %p71 = por %p69, %p70
    %p72 = scmp.ne.s32.totalorder %s61, %s64
    %p73 = scmp.eq.s32.totalorder %s16, 3
    %p74 = por %p72, %p73
    %p75 = scmp.ne.s32.totalorder %s64, %s65
    %p76 = scmp.eq.s32.totalorder %s16, 0
    %p77 = por %p75, %p76
    %p78 = scmp.ne.s32.totalorder %s64, %s65
    %p79 = scmp.eq.s32.totalorder %s17, 3
    %p80 = por %p78, %p79
    %p82 = scmp.ne.s32.totalorder %s65, %s81
    %p83 = scmp.eq.s32.totalorder %s17, 0
    %p84 = por %p82, %p83
    %s86 = sadd.s32 %s85, 1
    %p89 = scmp.eq.s32.totalorder %s11, 3
    %p90 = scmp.ne.s32.totalorder %s85, %s87
    %p91 = scmp.eq.s32.totalorder %s11, 0
    %p92 = por %p90, %p91
    %p93 = scmp.ne.s32.totalorder %s85, %s87
    %p94 = scmp.eq.s32.totalorder %s16, 3
    %p95 = por %p93, %p94
    %p96 = scmp.ne.s32.totalorder %s87, %s88
    %p97 = scmp.eq.s32.totalorder %s16, 0
    %p98 = por %p96, %p97
    %p99 = scmp.ne.s32.totalorder %s87, %s88
    %p100 = scmp.eq.s32.totalorder %s17, 3
    %p101 = por %p99, %p100
    %p103 = scmp.ne.s32.totalorder %s88, %s102
    %p104 = scmp.eq.s32.totalorder %s17, 0
    %p105 = por %p103, %p104
    %s106 = ssub.s32 %s18, %s30
    %s107 = ssub.s32 %s19, %s26
    %s108 = sor.u32 %s106, %s107
    %p109 = scmp.eq.s32.totalorder %s108, 0
    %s111 = sadd.s32 %s110, 1
    %s112 = scalar_select %p109, %s110, %s111
    %p115 = pneg %p109
    %p116 = scmp.eq.s32.totalorder %s11, 3
    %p117 = por %p115, %p116
    %p118 = scmp.ne.s32.totalorder %s110, %s113
    %p119 = scmp.eq.s32.totalorder %s11, 0
    %p120 = por %p118, %p119
    %p121 = scmp.ne.s32.totalorder %s110, %s113
    %p122 = scmp.eq.s32.totalorder %s16, 3
    %p123 = por %p121, %p122
    %p124 = scmp.ne.s32.totalorder %s113, %s114
    %p125 = scmp.eq.s32.totalorder %s16, 0
    %p126 = por %p124, %p125
    %p127 = scmp.ne.s32.totalorder %s113, %s114
    %p128 = scmp.eq.s32.totalorder %s17, 3
    %p129 = por %p127, %p128
    %p131 = scmp.ne.s32.totalorder %s114, %s130
    %p132 = scmp.eq.s32.totalorder %s17, 0
    %p133 = por %p131, %p132
    %s134 = ssub.s32 %s18, %s30
    %s135 = ssub.s32 %s19, %s26
    %s136 = sor.u32 %s134, %s135
    %p137 = scmp.eq.s32.totalorder %s136, 0
    %s139 = sadd.s32 %s138, 1
    %s140 = scalar_select %p137, %s138, %s139
    %p143 = pneg %p137
    %p144 = scmp.eq.s32.totalorder %s11, 3
    %p145 = por %p143, %p144
    %p146 = scmp.ne.s32.totalorder %s138, %s141
    %p147 = scmp.eq.s32.totalorder %s11, 0
    %p148 = por %p146, %p147
    %p149 = scmp.ne.s32.totalorder %s138, %s141
    %p150 = scmp.eq.s32.totalorder %s16, 3
    %p151 = por %p149, %p150
    %p152 = scmp.ne.s32.totalorder %s141, %s142
    %p153 = scmp.eq.s32.totalorder %s16, 0
    %p154 = por %p152, %p153
    %p155 = scmp.ne.s32.totalorder %s141, %s142
    %p156 = scmp.eq.s32.totalorder %s17, 3
    %p157 = por %p155, %p156
    %p159 = scmp.ne.s32.totalorder %s142, %s158
    %p160 = scmp.eq.s32.totalorder %s17, 0
    %p161 = por %p159, %p160
    %p162 = scmp.le.s32.totalorder 1, %s11
    %p163 = scmp.lt.s32.totalorder %s11, 5
    %p164 = pnand %p162, %p163
    %p165 = pneg %p164
    // Predicated region
    $region9: #{_forward_impl.13} parent=5 // pred_check
      _
    $region10: #{_forward_impl.13} parent=5 // pred_check_branch
      %167 = sbr.rel (%p164) target = $region12
    $region11: #{_forward_impl.13} parent=5 // pred_region
      %s168 = ssub.s32 %s11, 1
      // Predicated region
      $region13: #{_forward_impl.13} parent=11 // pred_check
        %p169 = pneg %p98
      $region14: #{_forward_impl.13} parent=11 // pred_check_branch
        %171 = sbr.rel (%p169) target = $region16
      $region15: #{_forward_impl.13} parent=11 // pred_region
        _
      $region16: #{_forward_impl.13} parent=11 // pred_fallthru
        _
    $region12: #{_forward_impl.13} parent=5 // pred_fallthru
      _
    %p172 = scmp.lt.s32.totalorder %s11, 4
    // Predicated region
    $region17: #{_forward_impl.13} parent=5 // pred_check
      %p173 = pneg %p172
    $region18: #{_forward_impl.13} parent=5 // pred_check_branch
      %175 = sbr.rel (%p173) target = $region20
    $region19: #{_forward_impl.13} parent=5 // pred_region
      // Predicated region
      $region21: #{_forward_impl.13} parent=19 // pred_check
        %p176 = pneg %p45
      $region22: #{_forward_impl.13} parent=19 // pred_check_branch
        %178 = sbr.rel (%p176) target = $region24
      $region23: #{_forward_impl.13} parent=19 // pred_region
        %s179 = smul.u32 16, %s19
        %p180 = scmp.lt.s32.totalorder %s18, 3
        %s181 = scalar_select %p180, %s18, 3
        %p182 = scmp.lt.s32.totalorder %s179, 15
        %s183 = scalar_select %p182, %s179, 15
        %s184 = smul.addr %s181, 16
        %s185 = sadd.s32 %s183, %s184
        %s186 = smul.addr %s185, 4
        %s187 = scalar_lea.vmem %s0, %s186
        %s188 = smul.u32 16, %s19
      $region24: #{_forward_impl.13} parent=19 // pred_fallthru
        _
      // Predicated region
      $region25: #{_forward_impl.13} parent=19 // pred_check
        %p189 = pneg %p71
      $region26: #{_forward_impl.13} parent=19 // pred_check_branch
        %191 = sbr.rel (%p189) target = $region28
      $region27: #{_forward_impl.13} parent=19 // pred_region
        %p192 = scmp.lt.s32.totalorder %s18, 3
        %s193 = scalar_select %p192, %s18, 3
        %s194 = smul.addr %s193, 8
        %s195 = smul.addr %s194, 4
        %s196 = scalar_lea.vmem %s1, %s195
      $region28: #{_forward_impl.13} parent=19 // pred_fallthru
        _
    $region20: #{_forward_impl.13} parent=5 // pred_fallthru
      _
    %p197 = scmp.le.s32.totalorder 1, %s11
    %p198 = scmp.lt.s32.totalorder %s11, 5
    %p199 = pnand %p197, %p198
    %p200 = pneg %p199
    // Predicated region
    $region29: #{_forward_impl.13} parent=5 // pred_check
      _
    $region30: #{_forward_impl.13} parent=5 // pred_check_branch
      %202 = sbr.rel (%p199) target = $region32
    $region31: #{_forward_impl.13} parent=5 // pred_region
      %s203 = ssub.s32 %s11, 1
      %s204 = smul.u32 16, %s21
      %p205 = scmp.lt.s32.totalorder %s20, 3
      %s206 = scalar_select %p205, %s20, 3
      %p207 = scmp.lt.s32.totalorder %s204, 15
      %s208 = scalar_select %p207, %s204, 15
      %s209 = smul.addr %s206, 16
      %s210 = sadd.s32 %s208, %s209
      %s211 = smul.addr %s210, 4
      %s212 = scalar_lea.vmem %s0, %s211
      %p213 = pneg %p51
      %p214 = pneg %p48
      %p215 = scmp.lt.s32.totalorder %s20, 3
      %s216 = scalar_select %p215, %s20, 3
      %s217 = smul.addr %s216, 8
      %s218 = smul.addr %s217, 4
      %s219 = scalar_lea.vmem %s1, %s218
      %p220 = pneg %p77
      %p221 = pneg %p74
      %p222 = pneg %p98
      %p223 = pneg %p95
      %p224 = pneg %p126
      %p225 = pneg %p123
      %s226 = smul.u32 16, %s21
      %p227 = scmp.lt.s32.totalorder %s20, 3
      %s228 = scalar_select %p227, %s20, 3
      %p229 = scmp.lt.s32.totalorder %s226, 15
      %s230 = scalar_select %p229, %s226, 15
      %s231 = smul.addr %s228, 16
      %s232 = sadd.s32 %s230, %s231
      %s233 = smul.addr %s232, 4
      %s234 = scalar_lea.vmem %s3, %s233
      %p235 = pneg %p154
      %p236 = pneg %p151
      %p237 = scmp.lt.s32.totalorder %s20, 3
      %s238 = scalar_select %p237, %s20, 3
      %p239 = scmp.lt.s32.totalorder %s21, 0
      %s240 = scalar_select %p239, %s21, 0
      %s241 = sadd.s32 %s240, %s238
      %s242 = smul.addr %s241, 2
      %s243 = scalar_lea.vmem %s4, %s242
      %s244 = smul.u32 16, %s21
      %p245 = scmp.lt.s32.totalorder %s20, 3
      %s246 = scalar_select %p245, %s20, 3
      %p247 = scmp.lt.s32.totalorder %s244, 15
      %s248 = scalar_select %p247, %s244, 15
      %s249 = smul.addr %s246, 16
      %s250 = sadd.s32 %s248, %s249
      %s251 = smul.addr %s250, 4
      %s252 = scalar_lea.vmem %s0, %s251
      %s253 = smul.u32 16, %s21
      %p254 = scmp.lt.s32.totalorder %s20, 3
      %s255 = scalar_select %p254, %s20, 3
      %s256 = smul.addr %s255, 8
      %s257 = smul.addr %s256, 4
      %s258 = scalar_lea.vmem %s1, %s257
      %s259 = smul.u32 16, %s21
      %p260 = scmp.lt.s32.totalorder %s20, 3
      %s261 = scalar_select %p260, %s20, 3
      %p262 = scmp.lt.s32.totalorder %s259, 15
      %s263 = scalar_select %p262, %s259, 15
      %s264 = smul.addr %s261, 16
      %s265 = sadd.s32 %s263, %s264
      %s266 = smul.addr %s265, 4
      %s267 = scalar_lea.vmem %s3, %s266
      %s268 = smul.u32 16, %s21
      %p269 = scmp.lt.s32.totalorder %s20, 3
      %s270 = scalar_select %p269, %s20, 3
      %p271 = scmp.lt.s32.totalorder %s21, 0
      %s272 = scalar_select %p271, %s21, 0
      %s273 = sadd.s32 %s272, %s270
      %s274 = smul.addr %s273, 2
      %s275 = scalar_lea.vmem %s4, %s274
      %v277 = vld [vmem:[%s252] sm:$0xf]
      %v278 = vld [vmem:[%s252 + $0x4] sm:$0xf]
      %v279 = vld [vmem:[%s252 + $0x8] sm:$0xf]
      %v280 = vld [vmem:[%s252 + $0xc] sm:$0xf]
      %v281 = vld [vmem:[%s252 + $0x10] sm:$0xf]
      %v282 = vld [vmem:[%s252 + $0x14] sm:$0xf]
      %v283 = vld [vmem:[%s252 + $0x18] sm:$0xf]
      %v284 = vld [vmem:[%s252 + $0x1c] sm:$0xf]
      %v285 = vld [vmem:[%s252 + $0x20] sm:$0xf]
      %v286 = vld [vmem:[%s252 + $0x24] sm:$0xf]
      %v287 = vld [vmem:[%s252 + $0x28] sm:$0xf]
      %v288 = vld [vmem:[%s252 + $0x2c] sm:$0xf]
      %v289 = vld [vmem:[%s252 + $0x30] sm:$0xf]
      %v290 = vld [vmem:[%s252 + $0x34] sm:$0xf]
      %v291 = vld [vmem:[%s252 + $0x38] sm:$0xf]
      %v292 = vld [vmem:[%s252 + $0x3c] sm:$0xf]
      %v293 = vld [vmem:[%s258] sm:$0xf]
      %v294 = vld [vmem:[%s258 + $0x4] sm:$0xf]
      %v295 = vld [vmem:[%s258 + $0x8] sm:$0xf]
      %v296 = vld [vmem:[%s258 + $0xc] sm:$0xf]
      %v297 = vld [vmem:[%s258 + $0x10] sm:$0xf]
      %v298 = vld [vmem:[%s258 + $0x14] sm:$0xf]
      %v299 = vld [vmem:[%s258 + $0x18] sm:$0xf]
      %v300 = vld [vmem:[%s258 + $0x1c] sm:$0xf]
      %v301 = vld [vmem:[%s2] sm:$0x1]
      %v303 = vperm.slane %v301, 0
      %v321 = vunpack.c.l.b16 %v277
      %v322 = vunpack.c.l.b16 %v278
      %v323 = vunpack.c.l.b16 %v279
      %v324 = vunpack.c.l.b16 %v280
      %v325 = vunpack.c.l.b16 %v281
      %v326 = vunpack.c.l.b16 %v282
      %v327 = vunpack.c.l.b16 %v283
      %v328 = vunpack.c.l.b16 %v284
      %v329 = vunpack.c.l.b16 %v285
      %v330 = vunpack.c.l.b16 %v286
      %v331 = vunpack.c.l.b16 %v287
      %v332 = vunpack.c.l.b16 %v288
      %v333 = vunpack.c.l.b16 %v289
      %v334 = vunpack.c.l.b16 %v290
      %v335 = vunpack.c.l.b16 %v291
      %v336 = vunpack.c.l.b16 %v292
      %v337 = vpack.c.b16 %v322, %v321
      %v338 = vpack.c.b16 %v324, %v323
      %v339 = vpack.c.b16 %v326, %v325
      %v340 = vpack.c.b16 %v328, %v327
      %v341 = vpack.c.b16 %v330, %v329
      %v342 = vpack.c.b16 %v332, %v331
      %v343 = vpack.c.b16 %v334, %v333
      %v344 = vpack.c.b16 %v336, %v335
      %v353 = vunpack.c.l.b16 %v293
      %v354 = vunpack.c.l.b16 %v294
      %v355 = vunpack.c.l.b16 %v295
      %v356 = vunpack.c.l.b16 %v296
      %v357 = vunpack.c.l.b16 %v297
      %v358 = vunpack.c.l.b16 %v298
      %v359 = vunpack.c.l.b16 %v299
      %v360 = vunpack.c.l.b16 %v300
      %v361 = vpack.c.b16 %v354, %v353
      %v362 = vpack.c.b16 %v356, %v355
      %v363 = vpack.c.b16 %v358, %v357
      %v364 = vpack.c.b16 %v360, %v359
      %vm369 = vcmask 523264
      %v371 = vsel %vm369, %v337, 0
      %v374 = vsel %vm369, %v338, 0
      %v377 = vsel %vm369, %v339, 0
      %v380 = vsel %vm369, %v340, 0
      %v383 = vsel %vm369, %v341, 0
      %v386 = vsel %vm369, %v342, 0
      %v389 = vsel %vm369, %v343, 0
      %v392 = vsel %vm369, %v344, 0
      %394 = vmatpush.bf16.msra.mxu0 0
      %395 = vmatpush.bf16.msra.mxu0 0
      %396 = vmatpush.bf16.msra.mxu0 0
      %397 = vmatpush.bf16.msra.mxu0 0
      %398 = vmatpush.bf16.msra.mxu0 %v364
      %399 = vmatpush.bf16.msra.mxu0 %v363
      %400 = vmatpush.bf16.msra.mxu0 %v362
      %401 = vmatpush.bf16.msra.mxu0 %v361
      %402 = vmatmul.bf16.gmra.mxu0 %v371
      %v403 = vpop.f32.mrf.mxu0
      %v404 = vadd.f32 %v303, %v403
      %v405 = vpop.f32.mrf.mxu0
      %v406 = vadd.f32 %v303, %v405
      %407 = vmatmul.bf16.gmra.mxu0 %v374
      %v408 = vpop.f32.mrf.mxu0
      %v409 = vadd.f32 %v303, %v408
      %v410 = vpop.f32.mrf.mxu0
      %v411 = vadd.f32 %v303, %v410
      %412 = vmatmul.bf16.gmra.mxu0 %v377
      %v413 = vpop.f32.mrf.mxu0
      %v414 = vadd.f32 %v303, %v413
      %v415 = vpop.f32.mrf.mxu0
      %v416 = vadd.f32 %v303, %v415
      %417 = vmatmul.bf16.gmra.mxu0 %v380
      %v418 = vpop.f32.mrf.mxu0
      %v419 = vadd.f32 %v303, %v418
      %v420 = vpop.f32.mrf.mxu0
      %v421 = vadd.f32 %v303, %v420
      %422 = vmatmul.bf16.gmra.mxu0 %v383
      %v423 = vpop.f32.mrf.mxu0
      %v424 = vadd.f32 %v303, %v423
      %v425 = vpop.f32.mrf.mxu0
      %v426 = vadd.f32 %v303, %v425
      %427 = vmatmul.bf16.gmra.mxu0 %v386
      %v428 = vpop.f32.mrf.mxu0
      %v429 = vadd.f32 %v303, %v428
      %v430 = vpop.f32.mrf.mxu0
      %v431 = vadd.f32 %v303, %v430
      %432 = vmatmul.bf16.gmra.mxu0 %v389
      %v433 = vpop.f32.mrf.mxu0
      %v434 = vadd.f32 %v303, %v433
      %v435 = vpop.f32.mrf.mxu0
      %v436 = vadd.f32 %v303, %v435
      %437 = vmatmul.bf16.gmra.mxu0 %v392
      %v438 = vpop.f32.mrf.mxu0
      %v439 = vadd.f32 %v303, %v438
      %v440 = vpop.f32.mrf.mxu0
      %v441 = vadd.f32 %v303, %v440
      %442 = vdwg.mxu0
      %v443 = vpack.c.bf16 %v404, %v404
      %v444 = vpack.c.bf16 %v406, %v406
      %v445 = vpack.c.bf16 %v409, %v409
      %v446 = vpack.c.bf16 %v411, %v411
      %v447 = vpack.c.bf16 %v414, %v414
      %v448 = vpack.c.bf16 %v416, %v416
      %v449 = vpack.c.bf16 %v419, %v419
      %v450 = vpack.c.bf16 %v421, %v421
      %v451 = vpack.c.bf16 %v424, %v424
      %v452 = vpack.c.bf16 %v426, %v426
      %v453 = vpack.c.bf16 %v429, %v429
      %v454 = vpack.c.bf16 %v431, %v431
      %v455 = vpack.c.bf16 %v434, %v434
      %v456 = vpack.c.bf16 %v436, %v436
      %v457 = vpack.c.bf16 %v439, %v439
      %v458 = vpack.c.bf16 %v441, %v441
      %vm459 = vcmask 60416
      %460 = vst.msk [vmem:[%s267] sm:$0xf] %vm459, %v443
      %461 = vst.msk [vmem:[%s267 + $0x4] sm:$0xf] %vm459, %v444
      %462 = vst.msk [vmem:[%s267 + $0x8] sm:$0xf] %vm459, %v445
      %463 = vst.msk [vmem:[%s267 + $0xc] sm:$0xf] %vm459, %v446
      %464 = vst.msk [vmem:[%s267 + $0x10] sm:$0xf] %vm459, %v447
      %465 = vst.msk [vmem:[%s267 + $0x14] sm:$0xf] %vm459, %v448
      %466 = vst.msk [vmem:[%s267 + $0x18] sm:$0xf] %vm459, %v449
      %467 = vst.msk [vmem:[%s267 + $0x1c] sm:$0xf] %vm459, %v450
      %468 = vst.msk [vmem:[%s267 + $0x20] sm:$0xf] %vm459, %v451
      %469 = vst.msk [vmem:[%s267 + $0x24] sm:$0xf] %vm459, %v452
      %470 = vst.msk [vmem:[%s267 + $0x28] sm:$0xf] %vm459, %v453
      %471 = vst.msk [vmem:[%s267 + $0x2c] sm:$0xf] %vm459, %v454
      %472 = vst.msk [vmem:[%s267 + $0x30] sm:$0xf] %vm459, %v455
      %473 = vst.msk [vmem:[%s267 + $0x34] sm:$0xf] %vm459, %v456
      %474 = vst.msk [vmem:[%s267 + $0x38] sm:$0xf] %vm459, %v457
      %475 = vst.msk [vmem:[%s267 + $0x3c] sm:$0xf] %vm459, %v458
      %vm476 = vcmask 64512
      %v477 = vsel %vm476, %v404, 0.0
      %v478 = vsel %vm476, %v406, 0.0
      %v479 = vadd.f32 %v477, %v478
      %v480 = vsel %vm476, %v409, 0.0
      %v481 = vadd.f32 %v479, %v480
      %v482 = vsel %vm476, %v411, 0.0
      %v483 = vadd.f32 %v481, %v482
      %v484 = vsel %vm476, %v414, 0.0
      %v485 = vadd.f32 %v483, %v484
      %v486 = vsel %vm476, %v416, 0.0
      %v487 = vadd.f32 %v485, %v486
      %v488 = vsel %vm476, %v419, 0.0
      %v489 = vadd.f32 %v487, %v488
      %v490 = vsel %vm476, %v421, 0.0
      %v491 = vadd.f32 %v489, %v490
      %v492 = vsel %vm476, %v424, 0.0
      %v493 = vadd.f32 %v491, %v492
      %v494 = vsel %vm476, %v426, 0.0
      %v495 = vadd.f32 %v493, %v494
      %v496 = vsel %vm476, %v429, 0.0
      %v497 = vadd.f32 %v495, %v496
      %v498 = vsel %vm476, %v431, 0.0
      %v499 = vadd.f32 %v497, %v498
      %v500 = vsel %vm476, %v434, 0.0
      %v501 = vadd.f32 %v499, %v500
      %v502 = vsel %vm476, %v436, 0.0
      %v503 = vadd.f32 %v501, %v502
      %v504 = vsel %vm476, %v439, 0.0
      %v505 = vadd.f32 %v503, %v504
      %v506 = vsel %vm476, %v441, 0.0
      %v507 = vadd.f32 %v505, %v506
      %v508 = vrot.slane %v507, 4
      %v509 = vadd.f32 %v507, %v508
      %v510 = vrot.slane %v509, 2
      %v511 = vadd.f32 %v509, %v510
      %v512 = vrot.slane %v511, 1
      %v513 = vadd.f32 %v511, %v512
      %vm514 = vcmask 57344
      %515 = vst.msk [vmem:[%s275] sm:$0x1] %vm514, %v513
      %v516 = vmul.f32 %v404, %v404
      %v517 = vmul.f32 %v406, %v406
      %v518 = vmul.f32 %v409, %v409
      %v519 = vmul.f32 %v411, %v411
      %v520 = vmul.f32 %v414, %v414
      %v521 = vmul.f32 %v416, %v416
      %v522 = vmul.f32 %v419, %v419
      %v523 = vmul.f32 %v421, %v421
      %v524 = vmul.f32 %v424, %v424
      %v525 = vmul.f32 %v426, %v426
      %v526 = vmul.f32 %v429, %v429
      %v527 = vmul.f32 %v431, %v431
      %v528 = vmul.f32 %v434, %v434
      %v529 = vmul.f32 %v436, %v436
      %v530 = vmul.f32 %v439, %v439
      %v531 = vmul.f32 %v441, %v441
      %v532 = vsel %vm476, %v516, 0.0
      %v533 = vsel %vm476, %v517, 0.0
      %v534 = vadd.f32 %v532, %v533
      %v535 = vsel %vm476, %v518, 0.0
      %v536 = vadd.f32 %v534, %v535
      %v537 = vsel %vm476, %v519, 0.0
      %v538 = vadd.f32 %v536, %v537
      %v539 = vsel %vm476, %v520, 0.0
      %v540 = vadd.f32 %v538, %v539
      %v541 = vsel %vm476, %v521, 0.0
      %v542 = vadd.f32 %v540, %v541
      %v543 = vsel %vm476, %v522, 0.0
      %v544 = vadd.f32 %v542, %v543
      %v545 = vsel %vm476, %v523, 0.0
      %v546 = vadd.f32 %v544, %v545
      %v547 = vsel %vm476, %v524, 0.0
      %v548 = vadd.f32 %v546, %v547
      %v549 = vsel %vm476, %v525, 0.0
      %v550 = vadd.f32 %v548, %v549
      %v551 = vsel %vm476, %v526, 0.0
      %v552 = vadd.f32 %v550, %v551
      %v553 = vsel %vm476, %v527, 0.0
      %v554 = vadd.f32 %v552, %v553
      %v555 = vsel %vm476, %v528, 0.0
      %v556 = vadd.f32 %v554, %v555
      %v557 = vsel %vm476, %v529, 0.0
      %v558 = vadd.f32 %v556, %v557
      %v559 = vsel %vm476, %v530, 0.0
      %v560 = vadd.f32 %v558, %v559
      %v561 = vsel %vm476, %v531, 0.0
      %v562 = vadd.f32 %v560, %v561
      %v563 = vrot.slane %v562, 4
      %v564 = vadd.f32 %v562, %v563
      %v565 = vrot.slane %v564, 2
      %v566 = vadd.f32 %v564, %v565
      %v567 = vrot.slane %v566, 1
      %v568 = vadd.f32 %v566, %v567
      %569 = vst.msk [vmem:[%s275 + $0x1] sm:$0x1] %vm514, %v568
      %s570 = smul.u32 16, %s21
      %p571 = scmp.lt.s32.totalorder %s20, 3
      %s572 = scalar_select %p571, %s20, 3
      %p573 = scmp.lt.s32.totalorder %s570, 15
      %s574 = scalar_select %p573, %s570, 15
      %s575 = smul.addr %s572, 16
      %s576 = sadd.s32 %s574, %s575
      %s577 = smul.addr %s576, 4
      %s578 = scalar_lea.vmem %s3, %s577
      %p579 = scmp.lt.s32.totalorder %s20, 3
      %s580 = scalar_select %p579, %s20, 3
      %p581 = scmp.lt.s32.totalorder %s21, 0
      %s582 = scalar_select %p581, %s21, 0
      %s583 = sadd.s32 %s582, %s580
      %s584 = smul.addr %s583, 2
      %s585 = scalar_lea.vmem %s4, %s584
      // Predicated region
      $region33: #{_forward_impl.13} parent=31 // pred_check
        %p586 = pneg %p123
      $region34: #{_forward_impl.13} parent=31 // pred_check_branch
        %588 = sbr.rel (%p586) target = $region36
      $region35: #{_forward_impl.13} parent=31 // pred_region
        %s589 = smul.u32 16, %s21
      $region36: #{_forward_impl.13} parent=31 // pred_fallthru
        _
      // Predicated region
      $region37: #{_forward_impl.13} parent=31 // pred_check
        %p590 = pneg %p151
      $region38: #{_forward_impl.13} parent=31 // pred_check_branch
        %592 = sbr.rel (%p590) target = $region40
      $region39: #{_forward_impl.13} parent=31 // pred_region
        _
      $region40: #{_forward_impl.13} parent=31 // pred_fallthru
        _
    $region32: #{_forward_impl.13} parent=5 // pred_fallthru
      _
    %p593 = scmp.le.s32.totalorder 2, %s11
    // Predicated region
    $region41: #{_forward_impl.13} parent=5 // pred_check
      %p594 = pneg %p593
    $region42: #{_forward_impl.13} parent=5 // pred_check_branch
      %596 = sbr.rel (%p594) target = $region44
    $region43: #{_forward_impl.13} parent=5 // pred_region
      %s597 = ssub.s32 %s11, 2
      // Predicated region
      $region45: #{_forward_impl.13} parent=43 // pred_check
        %p598 = pneg %p129
      $region46: #{_forward_impl.13} parent=43 // pred_check_branch
        %600 = sbr.rel (%p598) target = $region48
      $region47: #{_forward_impl.13} parent=43 // pred_region
        %s601 = smul.u32 16, %s23
        %p602 = scmp.lt.s32.totalorder %s22, 3
        %s603 = scalar_select %p602, %s22, 3
        %p604 = scmp.lt.s32.totalorder %s601, 15
        %s605 = scalar_select %p604, %s601, 15
        %s606 = smul.addr %s603, 16
        %s607 = sadd.s32 %s605, %s606
        %s608 = smul.addr %s607, 4
        %s609 = scalar_lea.vmem %s3, %s608
      $region48: #{_forward_impl.13} parent=43 // pred_fallthru
        _
      // Predicated region
      $region49: #{_forward_impl.13} parent=43 // pred_check
        %p610 = pneg %p157
      $region50: #{_forward_impl.13} parent=43 // pred_check_branch
        %612 = sbr.rel (%p610) target = $region52
      $region51: #{_forward_impl.13} parent=43 // pred_region
        %p613 = scmp.lt.s32.totalorder %s22, 3
        %s614 = scalar_select %p613, %s22, 3
        %p615 = scmp.lt.s32.totalorder %s23, 0
        %s616 = scalar_select %p615, %s23, 0
        %s617 = sadd.s32 %s616, %s614
        %s618 = smul.addr %s617, 2
        %s619 = scalar_lea.vmem %s4, %s618
      $region52: #{_forward_impl.13} parent=43 // pred_fallthru
        _
    $region44: #{_forward_impl.13} parent=5 // pred_fallthru
      _
  $region6: #{_forward_impl.13} parent=0 // loop_footer
    %s15 = sadd.s32 1, %s11
  $region7: #{_forward_impl.13} parent=0 // loop_footer_branch
    %10 = sbr.rel target = $region3
  $region8: #{_forward_impl.13} parent=0 // loop_exit
    _

// kernel: _forward_impl.14
$region0: #{_forward_impl.14}
  #allocation0 [shape = 'u32[]', space=smem, size = 0x4, offset = 0x4, fixed_abs, tag = 'smem constant byte address 0x4 - core index']
  #allocation1 [shape = 'u32[72,128]{1,0:T(1,128)}', space=vmem, size = 0x9000, scoped, tag = 'internal scratch']
  %s0 = inlined_call_operand.vmem [shape: bf16[32,128], index: 0, kind: input, shape index: {}]
  %s1 = inlined_call_operand.vmem [shape: f32[1,128], index: 1, kind: input, shape index: {}]
  %s2 = inlined_call_operand.vmem [shape: f32[1,128], index: 2, kind: input, shape index: {}]
  %s3 = inlined_call_operand.vmem [shape: bf16[32,128], index: 3, kind: output, shape index: {}]
  %s4 = sld [smem:[#allocation0]]
  $region22: #{_forward_impl.14} parent=0
    _
  %s6 = ssub.s32 1, %s4
  %s7 = scalar_select 0, %s6, %s4
  // Predicated region
  $region2: #{_forward_impl.14} parent=0 // pred_check
    _
  $region3: #{_forward_impl.14} parent=0 // pred_check_branch
    %9 = sbr.rel (0) target = $region5
  $region4: #{_forward_impl.14} parent=0 // pred_region
    _
  $region5: #{_forward_impl.14} parent=0 // pred_fallthru
    _
  // Predicated region
  $region6: #{_forward_impl.14} parent=0 // pred_check
    _
  $region7: #{_forward_impl.14} parent=0 // pred_check_branch
    %11 = sbr.rel (0) target = $region9
  $region8: #{_forward_impl.14} parent=0 // pred_region
    _
  $region9: #{_forward_impl.14} parent=0 // pred_fallthru
    _
  // Predicated region
  $region10: #{_forward_impl.14} parent=0 // pred_check
    _
  $region11: #{_forward_impl.14} parent=0 // pred_check_branch
    %13 = sbr.rel (0) target = $region13
  $region12: #{_forward_impl.14} parent=0 // pred_region
    _
  $region13: #{_forward_impl.14} parent=0 // pred_fallthru
    _
  %v14 = vld [vmem:[%s0] sm:$0xf]
  %v15 = vld [vmem:[%s0 + $0x4] sm:$0xf]
  %v16 = vld [vmem:[%s0 + $0x8] sm:$0xf]
  %v17 = vld [vmem:[%s0 + $0xc] sm:$0xf]
  %v18 = vunpack.c.l.bf16 %v14
  %v19 = vunpack.c.l.bf16 %v15
  %v20 = vunpack.c.l.bf16 %v16
  %v21 = vunpack.c.l.bf16 %v17
  %v22 = vld [vmem:[%s1] sm:$0x1]
  %v24 = vperm.slane %v22, 0
  %v26 = vmul.f32 %v18, %v24
  %v27 = vmul.f32 %v19, %v24
  %v28 = vmul.f32 %v20, %v24
  %v29 = vmul.f32 %v21, %v24
  %v30 = vld [vmem:[%s2] sm:$0x1]
  %v32 = vperm.slane %v30, 0
  %v34 = vadd.f32 %v26, %v32
  %v35 = vadd.f32 %v27, %v32
  %v36 = vadd.f32 %v28, %v32
  %v37 = vadd.f32 %v29, %v32
  %v38 = vmax.f32 %v34, 0.0
  %v39 = vmax.f32 %v35, 0.0
  %v40 = vmax.f32 %v36, 0.0
  %v41 = vmax.f32 %v37, 0.0
  %v42 = vpack.c.bf16 %v38, %v38
  %v43 = vpack.c.bf16 %v39, %v39
  %v44 = vpack.c.bf16 %v40, %v40
  %v45 = vpack.c.bf16 %v41, %v41
  %46 = vst [vmem:[%s3] sm:$0xf] %v42
  %47 = vst [vmem:[%s3 + $0x4] sm:$0xf] %v43
  %48 = vst [vmem:[%s3 + $0x8] sm:$0xf] %v44
  %49 = vst [vmem:[%s3 + $0xc] sm:$0xf] %v45
  // Predicated region
  $region14: #{_forward_impl.14} parent=0 // pred_check
    _
  $region15: #{_forward_impl.14} parent=0 // pred_check_branch
    %51 = sbr.rel (0) target = $region17
  $region16: #{_forward_impl.14} parent=0 // pred_region
    _
  $region17: #{_forward_impl.14} parent=0 // pred_fallthru
    _
  // Predicated region
  $region18: #{_forward_impl.14} parent=0 // pred_check
    _
  $region19: #{_forward_impl.14} parent=0 // pred_check_branch
    %53 = sbr.rel (0) target = $region21
  $region20: #{_forward_impl.14} parent=0 // pred_region
    _
  $region21: #{_forward_impl.14} parent=0 // pred_fallthru
    _

// kernel: _forward_impl.15
$region0: #{_forward_impl.15}
  #allocation0 [shape = 'u32[]', space=smem, size = 0x4, offset = 0x4, fixed_abs, tag = 'smem constant byte address 0x4 - core index']
  #allocation1 [shape = 'u32[72,128]{1,0:T(1,128)}', space=vmem, size = 0x9000, scoped, tag = 'internal scratch']
  %s0 = inlined_call_operand.vmem [shape: bf16[2,256,8], index: 0, kind: input, shape index: {}]
  %s1 = inlined_call_operand.vmem [shape: bf16[3,8], index: 1, kind: input, shape index: {}]
  %s2 = inlined_call_operand.vmem [shape: f32[3,1], index: 2, kind: input, shape index: {}]
  %s3 = inlined_call_operand.vmem [shape: f32[2,3,256], index: 3, kind: output, shape index: {}]
  %s4 = sld [smem:[#allocation0]]
  $region45: #{_forward_impl.15} parent=0
    _
  %s6 = ssub.s32 1, %s4
  %s7 = scalar_select 0, %s6, %s4
  loop: start=0, step=1, limit=4
  $region2: #{_forward_impl.15} parent=0 // loop_pre_header
    _
  $region3: #{_forward_impl.15} parent=0 // loop_header
    %s9 = sphi 0, %s13
    %p10 = scmp.ge.s32.totalorder %s9, 4
    %s19 = sphi 0, %s21
    %s22 = sphi 0, %s19
    %s23 = sphi 0, %s22
    %s39 = sphi 0, %s23
    %s43 = sphi 0, %s43
    %s45 = sphi 0, %s43
    %s46 = sphi 0, %s45
    %s60 = sphi 0, %s46
    %s64 = sphi 0, %s64
    %s66 = sphi 0, %s64
    %s67 = sphi 0, %s66
    %s81 = sphi 0, %s67
    %s87 = sphi 0, %s89
    %s90 = sphi 0, %s87
    %s91 = sphi 0, %s90
    %s107 = sphi 0, %s91
  $region4: #{_forward_impl.15} parent=0 // loop_header_branch
    %12 = sbr.rel (%p10) target = $region8
  $region5: #{_forward_impl.15} parent=0 // loop_body
    %s14 = ssub.s32 %s9, 1
    %s15 = ssub.s32 %s9, 2
    %s16 = sadd.s32 %s9, 1
    %s17 = ssub.s32 %s9, %s16
    %p18 = scmp.eq.s32.totalorder %s17, 0
    %s20 = sadd.s32 %s19, 1
    %s21 = scalar_select %p18, %s19, %s20
    %p24 = pneg %p18
    %p25 = scmp.eq.s32.totalorder %s9, 1
    %p26 = por %p24, %p25
    %p27 = scmp.ne.s32.totalorder %s19, %s22
    %p28 = scmp.eq.s32.totalorder %s9, 0
    %p29 = por %p27, %p28
    %p30 = scmp.ne.s32.totalorder %s19, %s22
    %p31 = scmp.eq.s32.totalorder %s14, 1
    %p32 = por %p30, %p31
    %p33 = scmp.ne.s32.totalorder %s22, %s23
    %p34 = scmp.eq.s32.totalorder %s14, 0
    %p35 = por %p33, %p34
    %p36 = scmp.ne.s32.totalorder %s22, %s23
    %p37 = scmp.eq.s32.totalorder %s15, 1
    %p38 = por %p36, %p37
    %p40 = scmp.ne.s32.totalorder %s23, %s39
    %p41 = scmp.eq.s32.totalorder %s15, 0
    %p42 = por %p40, %p41
    %s44 = sadd.s32 %s43, 1
    %p47 = scmp.eq.s32.totalorder %s9, 1
    %p48 = scmp.ne.s32.totalorder %s43, %s45
    %p49 = scmp.eq.s32.totalorder %s9, 0
    %p50 = por %p48, %p49
    %p51 = scmp.ne.s32.totalorder %s43, %s45
    %p52 = scmp.eq.s32.totalorder %s14, 1
    %p53 = por %p51, %p52
    %p54 = scmp.ne.s32.totalorder %s45, %s46
    %p55 = scmp.eq.s32.totalorder %s14, 0
    %p56 = por %p54, %p55
    %p57 = scmp.ne.s32.totalorder %s45, %s46
    %p58 = scmp.eq.s32.totalorder %s15, 1
    %p59 = por %p57, %p58
    %p61 = scmp.ne.s32.totalorder %s46, %s60
    %p62 = scmp.eq.s32.totalorder %s15, 0
    %p63 = por %p61, %p62
    %s65 = sadd.s32 %s64, 1
    %p68 = scmp.eq.s32.totalorder %s9, 1
    %p69 = scmp.ne.s32.totalorder %s64, %s66
    %p70 = scmp.eq.s32.totalorder %s9, 0
    %p71 = por %p69, %p70
    %p72 = scmp.ne.s32.totalorder %s64, %s66
    %p73 = scmp.eq.s32.totalorder %s14, 1
    %p74 = por %p72, %p73
    %p75 = scmp.ne.s32.totalorder %s66, %s67
    %p76 = scmp.eq.s32.totalorder %s14, 0
    %p77 = por %p75, %p76
    %p78 = scmp.ne.s32.totalorder %s66, %s67
    %p79 = scmp.eq.s32.totalorder %s15, 1
    %p80 = por %p78, %p79
    %p82 = scmp.ne.s32.totalorder %s67, %s81
    %p83 = scmp.eq.s32.totalorder %s15, 0
    %p84 = por %p82, %p83
    %s85 = ssub.s32 %s9, %s16
    %p86 = scmp.eq.s32.totalorder %s85, 0
    %s88 = sadd.s32 %s87, 1
    %s89 = scalar_select %p86, %s87, %s88
    %p92 = pneg %p86
    %p93 = scmp.eq.s32.totalorder %s9, 1
    %p94 = por %p92, %p93
    %p95 = scmp.ne.s32.totalorder %s87, %s90
    %p96 = scmp.eq.s32.totalorder %s9, 0
    %p97 = por %p95, %p96
    %p98 = scmp.ne.s32.totalorder %s87, %s90
    %p99 = scmp.eq.s32.totalorder %s14, 1
    %p100 = por %p98, %p99
    %p101 = scmp.ne.s32.totalorder %s90, %s91
    %p102 = scmp.eq.s32.totalorder %s14, 0
    %p103 = por %p101, %p102
    %p104 = scmp.ne.s32.totalorder %s90, %s91
    %p105 = scmp.eq.s32.totalorder %s15, 1
    %p106 = por %p104, %p105
    %p108 = scmp.ne.s32.totalorder %s91, %s107
    %p109 = scmp.eq.s32.totalorder %s15, 0
    %p110 = por %p108, %p109
    %p111 = scmp.le.s32.totalorder 1, %s9
    %p112 = scmp.lt.s32.totalorder %s9, 3
    %p113 = pnand %p111, %p112
    %p114 = pneg %p113
    // Predicated region
    $region9: #{_forward_impl.15} parent=5 // pred_check
      _
    $region10: #{_forward_impl.15} parent=5 // pred_check_branch
      %116 = sbr.rel (%p113) target = $region12
    $region11: #{_forward_impl.15} parent=5 // pred_region
      %s117 = ssub.s32 %s9, 1
      // Predicated region
      $region13: #{_forward_impl.15} parent=11 // pred_check
        %p118 = pneg %p56
      $region14: #{_forward_impl.15} parent=11 // pred_check_branch
        %120 = sbr.rel (%p118) target = $region16
      $region15: #{_forward_impl.15} parent=11 // pred_region
        _
      $region16: #{_forward_impl.15} parent=11 // pred_fallthru
        _
      // Predicated region
      $region17: #{_forward_impl.15} parent=11 // pred_check
        %p121 = pneg %p77
      $region18: #{_forward_impl.15} parent=11 // pred_check_branch
        %123 = sbr.rel (%p121) target = $region20
      $region19: #{_forward_impl.15} parent=11 // pred_region
        _
      $region20: #{_forward_impl.15} parent=11 // pred_fallthru
        _
    $region12: #{_forward_impl.15} parent=5 // pred_fallthru
      _
    %p124 = scmp.lt.s32.totalorder %s9, 2
    // Predicated region
    $region21: #{_forward_impl.15} parent=5 // pred_check
      %p125 = pneg %p124
    $region22: #{_forward_impl.15} parent=5 // pred_check_branch
      %127 = sbr.rel (%p125) target = $region24
    $region23: #{_forward_impl.15} parent=5 // pred_region
      // Predicated region
      $region25: #{_forward_impl.15} parent=23 // pred_check
        %p128 = pneg %p29
      $region26: #{_forward_impl.15} parent=23 // pred_check_branch
        %130 = sbr.rel (%p128) target = $region28
      $region27: #{_forward_impl.15} parent=23 // pred_region
        %p131 = scmp.lt.s32.totalorder %s9, 1
        %s132 = scalar_select %p131, %s9, 1
        %s133 = smul.addr %s132, 32
        %s134 = smul.addr %s133, 4
        %s135 = scalar_lea.vmem %s0, %s134
      $region28: #{_forward_impl.15} parent=23 // pred_fallthru
        _
    $region24: #{_forward_impl.15} parent=5 // pred_fallthru
      _
    %p136 = scmp.le.s32.totalorder 1, %s9
    %p137 = scmp.lt.s32.totalorder %s9, 3
    %p138 = pnand %p136, %p137
    %p139 = pneg %p138
    // Predicated region
    $region29: #{_forward_impl.15} parent=5 // pred_check
      _
    $region30: #{_forward_impl.15} parent=5 // pred_check_branch
      %141 = sbr.rel (%p138) target = $region32
    $region31: #{_forward_impl.15} parent=5 // pred_region
      %s142 = ssub.s32 %s9, 1
      %p143 = scmp.lt.s32.totalorder %s14, 1
      %s144 = scalar_select %p143, %s14, 1
      %s145 = smul.addr %s144, 32
      %s146 = smul.addr %s145, 4
      %s147 = scalar_lea.vmem %s0, %s146
      %p148 = pneg %p35
      %p149 = pneg %p32
      %p150 = pneg %p56
      %p151 = pneg %p53
      %p152 = pneg %p77
      %p153 = pneg %p74
      %p154 = pneg %p103
      %p155 = pneg %p100
      %p156 = scmp.lt.s32.totalorder %s14, 1
      %s157 = scalar_select %p156, %s14, 1
      %s158 = smul.addr %s157, 2
      %s159 = smul.addr %s158, 4
      %s160 = scalar_lea.vmem %s3, %s159
      %p161 = scmp.lt.s32.totalorder %s14, 1
      %s162 = scalar_select %p161, %s14, 1
      %s163 = smul.addr %s162, 32
      %s164 = smul.addr %s163, 4
      %s165 = scalar_lea.vmem %s0, %s164
      %p166 = scmp.lt.s32.totalorder %s14, 1
      %s167 = scalar_select %p166, %s14, 1
      %s168 = smul.addr %s167, 2
      %s169 = smul.addr %s168, 4
      %s170 = scalar_lea.vmem %s3, %s169
      %v171 = vld [vmem:[%s1] sm:$0x3]
      %v172 = vld [vmem:[%s165] sm:$0xf]
      %v173 = vld [vmem:[%s165 + $0x4] sm:$0xf]
      %v174 = vld [vmem:[%s165 + $0x8] sm:$0xf]
      %v175 = vld [vmem:[%s165 + $0xc] sm:$0xf]
      %v176 = vld [vmem:[%s165 + $0x10] sm:$0xf]
      %v177 = vld [vmem:[%s165 + $0x14] sm:$0xf]
      %v178 = vld [vmem:[%s165 + $0x18] sm:$0xf]
      %v179 = vld [vmem:[%s165 + $0x1c] sm:$0xf]
      %v180 = vld [vmem:[%s165 + $0x20] sm:$0xf]
      %v181 = vld [vmem:[%s165 + $0x24] sm:$0xf]
      %v182 = vld [vmem:[%s165 + $0x28] sm:$0xf]
      %v183 = vld [vmem:[%s165 + $0x2c] sm:$0xf]
      %v184 = vld [vmem:[%s165 + $0x30] sm:$0xf]
      %v185 = vld [vmem:[%s165 + $0x34] sm:$0xf]
      %v186 = vld [vmem:[%s165 + $0x38] sm:$0xf]
      %v187 = vld [vmem:[%s165 + $0x3c] sm:$0xf]
      %v188 = vld [vmem:[%s165 + $0x40] sm:$0xf]
      %v189 = vld [vmem:[%s165 + $0x44] sm:$0xf]
      %v190 = vld [vmem:[%s165 + $0x48] sm:$0xf]
      %v191 = vld [vmem:[%s165 + $0x4c] sm:$0xf]
      %v192 = vld [vmem:[%s165 + $0x50] sm:$0xf]
      %v193 = vld [vmem:[%s165 + $0x54] sm:$0xf]
      %v194 = vld [vmem:[%s165 + $0x58] sm:$0xf]
      %v195 = vld [vmem:[%s165 + $0x5c] sm:$0xf]
      %v196 = vld [vmem:[%s165 + $0x60] sm:$0xf]
      %v197 = vld [vmem:[%s165 + $0x64] sm:$0xf]
      %v198 = vld [vmem:[%s165 + $0x68] sm:$0xf]
      %v199 = vld [vmem:[%s165 + $0x6c] sm:$0xf]
      %v200 = vld [vmem:[%s165 + $0x70] sm:$0xf]
      %v201 = vld [vmem:[%s165 + $0x74] sm:$0xf]
      %v202 = vld [vmem:[%s165 + $0x78] sm:$0xf]
      %v203 = vld [vmem:[%s165 + $0x7c] sm:$0xf]
      %v204 = vld [vmem:[%s2] sm:$0x7]
      %206 = vset.pattern.permute.xlu0 0
      %207 = vperm.xlu0 %206, %v204
      %v208 = vpop.permute.xlu0 %207
      %v242 = vunpack.c.l.b16 %v172
      %v243 = vunpack.c.l.b16 %v173
      %v244 = vunpack.c.l.b16 %v174
      %v245 = vunpack.c.l.b16 %v175
      %v246 = vunpack.c.l.b16 %v176
      %v247 = vunpack.c.l.b16 %v177
      %v248 = vunpack.c.l.b16 %v178
      %v249 = vunpack.c.l.b16 %v179
      %v250 = vunpack.c.l.b16 %v180
      %v251 = vunpack.c.l.b16 %v181
      %v252 = vunpack.c.l.b16 %v182
      %v253 = vunpack.c.l.b16 %v183
      %v254 = vunpack.c.l.b16 %v184
      %v255 = vunpack.c.l.b16 %v185
      %v256 = vunpack.c.l.b16 %v186
      %v257 = vunpack.c.l.b16 %v187
      %v258 = vunpack.c.l.b16 %v188
      %v259 = vunpack.c.l.b16 %v189
      %v260 = vunpack.c.l.b16 %v190
      %v261 = vunpack.c.l.b16 %v191
      %v262 = vunpack.c.l.b16 %v192
      %v263 = vunpack.c.l.b16 %v193
      %v264 = vunpack.c.l.b16 %v194
      %v265 = vunpack.c.l.b16 %v195
      %v266 = vunpack.c.l.b16 %v196
      %v267 = vunpack.c.l.b16 %v197
      %v268 = vunpack.c.l.b16 %v198
      %v269 = vunpack.c.l.b16 %v199
      %v270 = vunpack.c.l.b16 %v200
      %v271 = vunpack.c.l.b16 %v201
      %v272 = vunpack.c.l.b16 %v202
      %v273 = vunpack.c.l.b16 %v203
      %v274 = vpack.c.b16 %v243, %v242
      %v275 = vpack.c.b16 %v245, %v244
      %v276 = vpack.c.b16 %v247, %v246
      %v277 = vpack.c.b16 %v249, %v248
      %v278 = vpack.c.b16 %v251, %v250
      %v279 = vpack.c.b16 %v253, %v252
      %v280 = vpack.c.b16 %v255, %v254
      %v281 = vpack.c.b16 %v257, %v256
      %v282 = vpack.c.b16 %v259, %v258
      %v283 = vpack.c.b16 %v261, %v260
      %v284 = vpack.c.b16 %v263, %v262
      %v285 = vpack.c.b16 %v265, %v264
      %v286 = vpack.c.b16 %v267, %v266
      %v287 = vpack.c.b16 %v269, %v268
      %v288 = vpack.c.b16 %v271, %v270
      %v289 = vpack.c.b16 %v273, %v272
      %vm290 = vcmask 64512
      %v292 = vsel %vm290, %v171, 0
      %v295 = vsel %vm290, %v274, 0
      %v298 = vsel %vm290, %v275, 0
      %v301 = vsel %vm290, %v276, 0
      %v304 = vsel %vm290, %v277, 0
      %v307 = vsel %vm290, %v278, 0
      %v310 = vsel %vm290, %v279, 0
      %v313 = vsel %vm290, %v280, 0
      %v316 = vsel %vm290, %v281, 0
      %v319 = vsel %vm290, %v282, 0
      %v322 = vsel %vm290, %v283, 0
      %v325 = vsel %vm290, %v284, 0
      %v328 = vsel %vm290, %v285, 0
      %v331 = vsel %vm290, %v286, 0
      %v334 = vsel %vm290, %v287, 0
      %v337 = vsel %vm290, %v288, 0
      %v340 = vsel %vm290, %v289, 0
      %342 = vmatpush.bf16.xpose.msra.mxu0 %v316
      %343 = vmatpush.bf16.xpose.msra.mxu0 %v313
      %344 = vmatpush.bf16.xpose.msra.mxu0 %v310
      %345 = vmatpush.bf16.xpose.msra.mxu0 %v307
      %346 = vmatpush.bf16.xpose.msra.mxu0 %v304
      %347 = vmatpush.bf16.xpose.msra.mxu0 %v301
      %348 = vmatpush.bf16.xpose.msra.mxu0 %v298
      %349 = vmatpush.bf16.xpose.msra.mxu0 %v295
      %350 = vmatmul.bf16.gmra.mxu0 %v292
      %v351 = vpop.f32.mrf.mxu0
      %v352 = vadd.f32 %v208, %v351
      %v353 = vpop.f32.mrf.mxu0
      %354 = vdwg.mxu0
      %355 = vmatpush.bf16.xpose.msra.mxu0 %v340
      %356 = vmatpush.bf16.xpose.msra.mxu0 %v337
      %357 = vmatpush.bf16.xpose.msra.mxu0 %v334
      %358 = vmatpush.bf16.xpose.msra.mxu0 %v331
      %359 = vmatpush.bf16.xpose.msra.mxu0 %v328
      %360 = vmatpush.bf16.xpose.msra.mxu0 %v325
      %361 = vmatpush.bf16.xpose.msra.mxu0 %v322
      %362 = vmatpush.bf16.xpose.msra.mxu0 %v319
      %363 = vmatmul.bf16.gmra.mxu0 %v292
      %v364 = vpop.f32.mrf.mxu0
      %v365 = vadd.f32 %v208, %v364
      %v366 = vpop.f32.mrf.mxu0
      %367 = vdwg.mxu0
      %v370 = vrot.slane %v365, 4
      %vm371 = vcmask 1043456
      %v372 = vsel %vm371, %v352, %v370
      %374 = vst [vmem:[%s170] sm:$0x77] %v372
      %p375 = scmp.lt.s32.totalorder %s14, 1
      %s376 = scalar_select %p375, %s14, 1
      %s377 = smul.addr %s376, 2
      %s378 = smul.addr %s377, 4
      %s379 = scalar_lea.vmem %s3, %s378
      // Predicated region
      $region33: #{_forward_impl.15} parent=31 // pred_check
        %p380 = pneg %p100
      $region34: #{_forward_impl.15} parent=31 // pred_check_branch
        %382 = sbr.rel (%p380) target = $region36
      $region35: #{_forward_impl.15} parent=31 // pred_region
        _
      $region36: #{_forward_impl.15} parent=31 // pred_fallthru
        _
    $region32: #{_forward_impl.15} parent=5 // pred_fallthru
      _
    %p383 = scmp.le.s32.totalorder 2, %s9
    // Predicated region
    $region37: #{_forward_impl.15} parent=5 // pred_check
      %p384 = pneg %p383
    $region38: #{_forward_impl.15} parent=5 // pred_check_branch
      %386 = sbr.rel (%p384) target = $region40
    $region39: #{_forward_impl.15} parent=5 // pred_region
      %s387 = ssub.s32 %s9, 2
      // Predicated region
      $region41: #{_forward_impl.15} parent=39 // pred_check
        %p388 = pneg %p106
      $region42: #{_forward_impl.15} parent=39 // pred_check_branch
        %390 = sbr.rel (%p388) target = $region44
      $region43: #{_forward_impl.15} parent=39 // pred_region
        %p391 = scmp.lt.s32.totalorder %s15, 1
        %s392 = scalar_select %p391, %s15, 1
        %s393 = smul.addr %s392, 2
        %s394 = smul.addr %s393, 4
        %s395 = scalar_lea.vmem %s3, %s394
      $region44: #{_forward_impl.15} parent=39 // pred_fallthru
        _
    $region40: #{_forward_impl.15} parent=5 // pred_fallthru
      _
  $region6: #{_forward_impl.15} parent=0 // loop_footer
    %s13 = sadd.s32 1, %s9
  $region7: #{_forward_impl.15} parent=0 // loop_footer_branch
    %8 = sbr.rel target = $region3
  $region8: #{_forward_impl.15} parent=0 // loop_exit
    _

</llo_original>
